<compile_context>
chip_gen: v5e
topology: v5e:2x2
jax: 0.10.0
libtpu: 0.0.40
codegen_flags: <defaults>
</compile_context>

<pallas_src>
import math

import jax
import jax.numpy as jnp
import numpy as np
from jax.experimental import pallas as pl
from jax.experimental.pallas import tpu as pltpu

_SLAB_W = 128  # lane width of the packed weight slab / output slab


def _round8(n):
    return ((n + 7) // 8) * 8


def _slab_layout(input_dim, hidden_dim):
    """Row offsets of each weight block inside the packed slab.
    Every block starts on a sublane-tile (8-row) boundary."""
    I, H = input_dim, hidden_dim
    off = {}
    off["wih1"] = 0
    off["b1"] = off["wih1"] + _round8(I)
    off["whh1"] = off["b1"] + 8
    off["wih2"] = off["whh1"] + _round8(H)
    off["whh2"] = off["wih2"] + _round8(H)
    off["b2"] = off["whh2"] + _round8(H)
    off["wfc"] = off["b2"] + 8
    off["bfc"] = off["wfc"] + _round8(H)
    rows = off["bfc"] + 8
    return off, rows


# ----------------------------- Pallas kernel ------------------------------- #
def _lstm_kernel(x_ref, state_ref, w_ref, out_ref, state_out_ref, h2seq_ref):
    """x_ref: (T*B, I) time-major flattened.  state_ref: (B, 4H) = [h1|c1|h2|c2].
    w_ref: packed weight slab.  out_ref: (T*B, 128) lane-dense FC output slab.
    state_out_ref: (B, 4H) packed final state.  h2seq_ref: (T*B, H) scratch."""
    TB, I = x_ref.shape
    B, G = state_ref.shape          # G = 4H
    H = G // 4
    T = TB // B
    off, _ = _slab_layout(I, H)

    # ---- unpack the single packed state buffer (value slices, off the loop path) ----
    st = state_ref[...]
    h1 = st[:, 0 * H:1 * H]
    c1 = st[:, 1 * H:2 * H]
    h2 = st[:, 2 * H:3 * H]
    c2 = st[:, 3 * H:4 * H]

    # ---- static-slice views into the packed weight slab (loaded once) ----
    wih1 = w_ref[off["wih1"]:off["wih1"] + I, 0:G]          # (I, 4H)
    b1 = w_ref[off["b1"]:off["b1"] + 1, 0:G]                # (1, 4H) == b_ih1 + b_hh1
    whh1 = w_ref[off["whh1"]:off["whh1"] + H, 0:G]          # (H, 4H)
    wih2 = w_ref[off["wih2"]:off["wih2"] + H, 0:G]          # (H, 4H)
    whh2 = w_ref[off["whh2"]:off["whh2"] + H, 0:G]          # (H, 4H)
    # bias-2 broadcast hoisted out of the unrolled loop (no per-step broadcast_in_dim)
    b2_b = jnp.broadcast_to(w_ref[off["b2"]:off["b2"] + 1, 0:G], (B, G))
    wfc = w_ref[off["wfc"]:off["wfc"] + H, :]               # (H, 128), zero-padded past I
    bfc = w_ref[off["bfc"]:off["bfc"] + 1, :]               # (1, 128)

    # ---- (1) hoisted layer-1 input projection: one (T*B,I)@(I,4H) MXU matmul ----
    pre1 = jnp.dot(x_ref[...], wih1, preferred_element_type=jnp.float32) + b1

    def gates_to_hc(gates, c):
        # sigmoid(x) = 0.5*tanh(0.5*x) + 0.5 : one EUP push covers i/f/o;
        # tanh only on the g column (its sigmoid lane is discarded).
        sg = 0.5 * jnp.tanh(0.5 * gates) + 0.5
        i = sg[:, 0 * H:1 * H]
        f = sg[:, 1 * H:2 * H]
        o = sg[:, 3 * H:4 * H]
        g = jnp.tanh(gates[:, 2 * H:3 * H])
        c_new = f * c + i * g
        h_new = o * jnp.tanh(c_new)
        return h_new, c_new

    # ---- (2) fully-unrolled recurrence (T static & small). Layer-2's recurrent
    #      matmul only depends on previous-step h2, so it is issued at the top of
    #      the step and overlaps with layer-1's activations; no lane concat. ----
    for t in range(T):
        g2_part = jnp.dot(h2, whh2, preferred_element_type=jnp.float32) + b2_b
        gates1 = pre1[t * B:(t + 1) * B, :] + jnp.dot(
            h1, whh1, preferred_element_type=jnp.float32)
        h1, c1 = gates_to_hc(gates1, c1)
        gates2 = jnp.dot(h1, wih2, preferred_element_type=jnp.float32) + g2_part
        h2, c2 = gates_to_hc(gates2, c2)
        h2seq_ref[t * B:(t + 1) * B, :] = h2                 # stash for deferred FC

    # ---- (3) deferred FC: one (T*B,H)@(H,128) matmul, lane-dense unmasked store ----
    y = jnp.dot(h2seq_ref[...], wfc, preferred_element_type=jnp.float32) + bfc
    out_ref[...] = y.astype(out_ref.dtype)

    # Packed final state: single concat + one full-width store (off the loop path).
    state_out_ref[...] = jnp.concatenate([h1, c1, h2, c2],
                                         axis=-1).astype(state_out_ref.dtype)


# -------------------- One-time parameter packing (outside jit path) -------------------- #
def pack_params(params, input_dim, hidden_dim):
    """Pack all transposed weights / folded biases into a single lane-dense
    (rows, 128) f32 slab with 8-row-aligned block offsets.  Call once at setup."""
    (wih1, whh1, bih1, bhh1, wih2, whh2, bih2, bhh2, wfc, bfc) = params
    I, H = input_dim, hidden_dim
    G = 4 * H
    assert G <= _SLAB_W and I <= _SLAB_W, "pack_params assumes 4H <= 128 and I <= 128"
    off, rows = _slab_layout(I, H)

    slab = np.zeros((rows, _SLAB_W), np.float32)
    slab[off["wih1"]:off["wih1"] + I, :G] = np.asarray(wih1).T          # (I, 4H)
    slab[off["b1"], :G] = np.asarray(bih1) + np.asarray(bhh1)           # folded layer-1 bias
    slab[off["whh1"]:off["whh1"] + H, :G] = np.asarray(whh1).T          # (H, 4H)
    slab[off["wih2"]:off["wih2"] + H, :G] = np.asarray(wih2).T          # (H, 4H)
    slab[off["whh2"]:off["whh2"] + H, :G] = np.asarray(whh2).T          # (H, 4H)
    slab[off["b2"], :G] = np.asarray(bih2) + np.asarray(bhh2)           # folded layer-2 bias
    slab[off["wfc"]:off["wfc"] + H, :I] = np.asarray(wfc).T             # (H, I) zero-padded
    slab[off["bfc"], :I] = np.asarray(bfc)
    return jnp.asarray(slab)


# ------------------------------ JAX wrapper -------------------------------- #
def multi_regression_lstm(x, hc_1, hc_2, w_slab):
    """x: (B, T, I); hc_1/hc_2: tuples of (B, H); w_slab: output of pack_params.
    Returns (out_seq (B, T, I), (h1, c1), (h2, c2)) matching the PyTorch forward."""
    B, T, I = x.shape
    H = hc_1[0].shape[-1]

    # Layout plumbing stays in the wrapper (free XLA ops): time-major flatten of x,
    # packing of the 4 state vectors into one lane-dense (B, 4H) buffer.
    x_flat = jnp.transpose(x, (1, 0, 2)).reshape(T * B, I)
    state_in = jnp.concatenate([hc_1[0], hc_1[1], hc_2[0], hc_2[1]], axis=-1)

    vmem = pl.BlockSpec(memory_space=pltpu.MemorySpace.VMEM)

    out_slab, state_out = pl.pallas_call(
        _lstm_kernel,
        out_shape=(
            jax.ShapeDtypeStruct((T * B, _SLAB_W), jnp.float32),   # lane-dense output slab
            jax.ShapeDtypeStruct((B, 4 * H), x.dtype),             # packed [h1|c1|h2|c2]
        ),
        in_specs=[vmem, vmem, vmem],
        out_specs=(vmem, vmem),
        scratch_shapes=[
            pltpu.VMEM((T * B, H), jnp.float32),                   # per-step h2 for deferred FC
        ],
        # TODO(synk): if B >= 16, add a batch grid with dimension_semantics=("parallel",)
        # so v7x's two TensorCores each run an independent B/2 recurrence.
    )(x_flat, state_in, w_slab)

    out_seq = out_slab[:, :I].reshape(T, B, I).transpose(1, 0, 2).astype(x.dtype)
    h1 = state_out[:, 0 * H:1 * H]
    c1 = state_out[:, 1 * H:2 * H]
    h2 = state_out[:, 2 * H:3 * H]
    c2 = state_out[:, 3 * H:4 * H]
    return out_seq, (h1, c1), (h2, c2)


# --------------------- Deterministic parameter creation --------------------- #
def init_params(key, input_dim, hidden_dim):
    """Mirror PyTorch default init: uniform(-1/sqrt(H), 1/sqrt(H))."""
    ks = jax.random.split(key, 10)
    s = 1.0 / math.sqrt(hidden_dim)

    def u(k, shape):
        return jax.random.uniform(k, shape, jnp.float32, minval=-s, maxval=s)

    wih1 = u(ks[0], (4 * hidden_dim, input_dim))
    whh1 = u(ks[1], (4 * hidden_dim, hidden_dim))
    bih1 = u(ks[2], (4 * hidden_dim,))
    bhh1 = u(ks[3], (4 * hidden_dim,))
    wih2 = u(ks[4], (4 * hidden_dim, hidden_dim))
    whh2 = u(ks[5], (4 * hidden_dim, hidden_dim))
    bih2 = u(ks[6], (4 * hidden_dim,))
    bhh2 = u(ks[7], (4 * hidden_dim,))
    wfc = u(ks[8], (input_dim, hidden_dim))
    bfc = u(ks[9], (input_dim,))
    return (wih1, whh1, bih1, bhh1, wih2, whh2, bih2, bhh2, wfc, bfc)


# --------------------------- Pure-JAX reference ----------------------------- #
def _reference(x, hc_1, hc_2, params):
    (wih1, whh1, bih1, bhh1, wih2, whh2, bih2, bhh2, wfc, bfc) = params
    H = hc_1[0].shape[-1]

    def cell(xt, h, c, wih, whh, bih, bhh):
        g = xt @ wih.T + bih + h @ whh.T + bhh
        i, f, gg, o = g[:, :H], g[:, H:2 * H], g[:, 2 * H:3 * H], g[:, 3 * H:]
        c_new = jax.nn.sigmoid(f) * c + jax.nn.sigmoid(i) * jnp.tanh(gg)
        h_new = jax.nn.sigmoid(o) * jnp.tanh(c_new)
        return h_new, c_new

    h1, c1 = hc_1
    h2, c2 = hc_2
    outs = []
    for t in range(x.shape[1]):
        h1, c1 = cell(x[:, t, :], h1, c1, wih1, whh1, bih1, bhh1)
        h2, c2 = cell(h1, h2, c2, wih2, whh2, bih2, bhh2)
        outs.append(h2 @ wfc.T + bfc)
    return jnp.stack(outs, axis=1), (h1, c1), (h2, c2)


# ----------------------------------- main ----------------------------------- #
if __name__ == "__main__":
    batch_size = 8
    time_steps = 8
    input_dim = 6
    hidden_dim = 16

    key = jax.random.PRNGKey(0)
    k_x, k_p = jax.random.split(key)

    x = jax.random.normal(k_x, (batch_size, time_steps, input_dim), jnp.float32)
    hc_1 = (jnp.zeros((batch_size, hidden_dim), jnp.float32),
            jnp.zeros((batch_size, hidden_dim), jnp.float32))
    hc_2 = (jnp.zeros((batch_size, hidden_dim), jnp.float32),
            jnp.zeros((batch_size, hidden_dim), jnp.float32))
    params = init_params(k_p, input_dim, hidden_dim)

    # One-time packing (transposes, bias folding, single lane-dense weight slab).
    w_slab = pack_params(params, input_dim, hidden_dim)

    fwd = jax.jit(multi_regression_lstm)
    out_seq, hc1_out, hc2_out = fwd(x, hc_1, hc_2, w_slab)
    jax.block_until_ready(out_seq)
    jax.block_until_ready(hc1_out)
    jax.block_until_ready(hc2_out)

    # Cross-check against pure-JAX reference (same math, same params).
    ref_seq, ref_hc1, ref_hc2 = _reference(x, hc_1, hc_2, params)
    np.testing.assert_allclose(np.asarray(out_seq), np.asarray(ref_seq), rtol=2e-5, atol=2e-5)
    np.testing.assert_allclose(np.asarray(hc1_out[0]), np.asarray(ref_hc1[0]), rtol=2e-5, atol=2e-5)
    np.testing.assert_allclose(np.asarray(hc1_out[1]), np.asarray(ref_hc1[1]), rtol=2e-5, atol=2e-5)
    np.testing.assert_allclose(np.asarray(hc2_out[0]), np.asarray(ref_hc2[0]), rtol=2e-5, atol=2e-5)
    np.testing.assert_allclose(np.asarray(hc2_out[1]), np.asarray(ref_hc2[1]), rtol=2e-5, atol=2e-5)

    print("KERNEL_OK")
</pallas_src>

<mosaic_0001>
module attributes {stable_mosaic.version = 11 : i64} {
  func.func @_lstm_kernel(%arg0: memref<64x6xf32, #tpu.memory_space<vmem>>, %arg1: memref<8x64xf32, #tpu.memory_space<vmem>>, %arg2: memref<96x128xf32, #tpu.memory_space<vmem>>, %arg3: memref<64x128xf32, #tpu.memory_space<vmem>>, %arg4: memref<8x64xf32, #tpu.memory_space<vmem>>, %arg5: memref<64x16xf32, #tpu.memory_space<vmem>>) attributes {dimension_semantics = [], scalar_prefetch = 0 : i64, scratch_operands = 1 : i64, tpu.core_type = #tpu.core_type<tc>} {
    %c0 = arith.constant 0 : index
    %c0_0 = arith.constant 0 : index
    %0 = vector.load %arg1[%c0, %c0_0] : memref<8x64xf32, #tpu.memory_space<vmem>>, vector<8x64xf32>
    %1 = vector.extract_strided_slice %0 {offsets = [0, 0], sizes = [8, 16], strides = [1, 1]} : vector<8x64xf32> to vector<8x16xf32>
    %2 = vector.extract_strided_slice %0 {offsets = [0, 16], sizes = [8, 16], strides = [1, 1]} : vector<8x64xf32> to vector<8x16xf32>
    %3 = vector.extract_strided_slice %0 {offsets = [0, 32], sizes = [8, 16], strides = [1, 1]} : vector<8x64xf32> to vector<8x16xf32>
    %4 = vector.extract_strided_slice %0 {offsets = [0, 48], sizes = [8, 16], strides = [1, 1]} : vector<8x64xf32> to vector<8x16xf32>
    %c0_1 = arith.constant 0 : index
    %c0_2 = arith.constant 0 : index
    %5 = vector.load %arg2[%c0_1, %c0_2] : memref<96x128xf32, #tpu.memory_space<vmem>>, vector<6x64xf32>
    %c8 = arith.constant 8 : index
    %c0_3 = arith.constant 0 : index
    %6 = vector.load %arg2[%c8, %c0_3] : memref<96x128xf32, #tpu.memory_space<vmem>>, vector<1x64xf32>
    %c16 = arith.constant 16 : index
    %c0_4 = arith.constant 0 : index
    %7 = vector.load %arg2[%c16, %c0_4] : memref<96x128xf32, #tpu.memory_space<vmem>>, vector<16x64xf32>
    %c32 = arith.constant 32 : index
    %c0_5 = arith.constant 0 : index
    %8 = vector.load %arg2[%c32, %c0_5] : memref<96x128xf32, #tpu.memory_space<vmem>>, vector<16x64xf32>
    %c48 = arith.constant 48 : index
    %c0_6 = arith.constant 0 : index
    %9 = vector.load %arg2[%c48, %c0_6] : memref<96x128xf32, #tpu.memory_space<vmem>>, vector<16x64xf32>
    %c64 = arith.constant 64 : index
    %c0_7 = arith.constant 0 : index
    %10 = vector.load %arg2[%c64, %c0_7] : memref<96x128xf32, #tpu.memory_space<vmem>>, vector<1x64xf32>
    %11 = vector.shape_cast %10 : vector<1x64xf32> to vector<1x64xf32>
    %12 = vector.broadcast %11 : vector<1x64xf32> to vector<8x64xf32>
    %c72 = arith.constant 72 : index
    %c0_8 = arith.constant 0 : index
    %13 = vector.load %arg2[%c72, %c0_8] : memref<96x128xf32, #tpu.memory_space<vmem>>, vector<16x128xf32>
    %c88 = arith.constant 88 : index
    %c0_9 = arith.constant 0 : index
    %14 = vector.load %arg2[%c88, %c0_9] : memref<96x128xf32, #tpu.memory_space<vmem>>, vector<1x128xf32>
    %c0_10 = arith.constant 0 : index
    %c0_11 = arith.constant 0 : index
    %15 = vector.load %arg0[%c0_10, %c0_11] : memref<64x6xf32, #tpu.memory_space<vmem>>, vector<64x6xf32>
    %cst = arith.constant dense<0.000000e+00> : vector<64x64xf32>
    %16 = tpu.matmul %15, %5, %cst {dimension_numbers = #tpu.dot_dimension_numbers<[1], [0], [0], [1], [0, 0, 1, 1], [], []>} : vector<64x6xf32>, vector<6x64xf32>, vector<64x64xf32> -> vector<64x64xf32>
    %17 = vector.broadcast %6 : vector<1x64xf32> to vector<64x64xf32>
    %18 = arith.addf %16, %17 : vector<64x64xf32>
    %cst_12 = arith.constant dense<0.000000e+00> : vector<8x64xf32>
    %19 = tpu.matmul %3, %9, %cst_12 {dimension_numbers = #tpu.dot_dimension_numbers<[1], [0], [0], [1], [0, 0, 1, 1], [], []>} : vector<8x16xf32>, vector<16x64xf32>, vector<8x64xf32> -> vector<8x64xf32>
    %20 = arith.addf %19, %12 : vector<8x64xf32>
    %21 = vector.extract_strided_slice %18 {offsets = [0, 0], sizes = [8, 64], strides = [1, 1]} : vector<64x64xf32> to vector<8x64xf32>
    %cst_13 = arith.constant dense<0.000000e+00> : vector<8x64xf32>
    %22 = tpu.matmul %1, %7, %cst_13 {dimension_numbers = #tpu.dot_dimension_numbers<[1], [0], [0], [1], [0, 0, 1, 1], [], []>} : vector<8x16xf32>, vector<16x64xf32>, vector<8x64xf32> -> vector<8x64xf32>
    %23 = arith.addf %21, %22 : vector<8x64xf32>
    %cst_14 = arith.constant 5.000000e-01 : f32
    %24 = vector.broadcast %cst_14 : f32 to vector<8x64xf32>
    %25 = arith.mulf %24, %23 : vector<8x64xf32>
    %26 = math.tanh %25 : vector<8x64xf32>
    %cst_15 = arith.constant 5.000000e-01 : f32
    %27 = vector.broadcast %cst_15 : f32 to vector<8x64xf32>
    %28 = arith.mulf %27, %26 : vector<8x64xf32>
    %cst_16 = arith.constant 5.000000e-01 : f32
    %29 = vector.broadcast %cst_16 : f32 to vector<8x64xf32>
    %30 = arith.addf %28, %29 : vector<8x64xf32>
    %31 = vector.extract_strided_slice %30 {offsets = [0, 0], sizes = [8, 16], strides = [1, 1]} : vector<8x64xf32> to vector<8x16xf32>
    %32 = vector.extract_strided_slice %30 {offsets = [0, 16], sizes = [8, 16], strides = [1, 1]} : vector<8x64xf32> to vector<8x16xf32>
    %33 = vector.extract_strided_slice %30 {offsets = [0, 48], sizes = [8, 16], strides = [1, 1]} : vector<8x64xf32> to vector<8x16xf32>
    %34 = vector.extract_strided_slice %23 {offsets = [0, 32], sizes = [8, 16], strides = [1, 1]} : vector<8x64xf32> to vector<8x16xf32>
    %35 = math.tanh %34 : vector<8x16xf32>
    %36 = arith.mulf %32, %2 : vector<8x16xf32>
    %37 = arith.mulf %31, %35 : vector<8x16xf32>
    %38 = arith.addf %36, %37 : vector<8x16xf32>
    %39 = math.tanh %38 : vector<8x16xf32>
    %40 = arith.mulf %33, %39 : vector<8x16xf32>
    %cst_17 = arith.constant dense<0.000000e+00> : vector<8x64xf32>
    %41 = tpu.matmul %40, %8, %cst_17 {dimension_numbers = #tpu.dot_dimension_numbers<[1], [0], [0], [1], [0, 0, 1, 1], [], []>} : vector<8x16xf32>, vector<16x64xf32>, vector<8x64xf32> -> vector<8x64xf32>
    %42 = arith.addf %41, %20 : vector<8x64xf32>
    %cst_18 = arith.constant 5.000000e-01 : f32
    %43 = vector.broadcast %cst_18 : f32 to vector<8x64xf32>
    %44 = arith.mulf %43, %42 : vector<8x64xf32>
    %45 = math.tanh %44 : vector<8x64xf32>
    %cst_19 = arith.constant 5.000000e-01 : f32
    %46 = vector.broadcast %cst_19 : f32 to vector<8x64xf32>
    %47 = arith.mulf %46, %45 : vector<8x64xf32>
    %cst_20 = arith.constant 5.000000e-01 : f32
    %48 = vector.broadcast %cst_20 : f32 to vector<8x64xf32>
    %49 = arith.addf %47, %48 : vector<8x64xf32>
    %50 = vector.extract_strided_slice %49 {offsets = [0, 0], sizes = [8, 16], strides = [1, 1]} : vector<8x64xf32> to vector<8x16xf32>
    %51 = vector.extract_strided_slice %49 {offsets = [0, 16], sizes = [8, 16], strides = [1, 1]} : vector<8x64xf32> to vector<8x16xf32>
    %52 = vector.extract_strided_slice %49 {offsets = [0, 48], sizes = [8, 16], strides = [1, 1]} : vector<8x64xf32> to vector<8x16xf32>
    %53 = vector.extract_strided_slice %42 {offsets = [0, 32], sizes = [8, 16], strides = [1, 1]} : vector<8x64xf32> to vector<8x16xf32>
    %54 = math.tanh %53 : vector<8x16xf32>
    %55 = arith.mulf %51, %4 : vector<8x16xf32>
    %56 = arith.mulf %50, %54 : vector<8x16xf32>
    %57 = arith.addf %55, %56 : vector<8x16xf32>
    %58 = math.tanh %57 : vector<8x16xf32>
    %59 = arith.mulf %52, %58 : vector<8x16xf32>
    %c0_21 = arith.constant 0 : index
    %c0_22 = arith.constant 0 : index
    %60 = vector.load %arg5[%c0_21, %c0_22] : memref<64x16xf32, #tpu.memory_space<vmem>>, vector<8x16xf32>
    tpu.vector_store %arg5[%c0_21, %c0_22], %59 {strides = array<i32>} : memref<64x16xf32, #tpu.memory_space<vmem>>, vector<8x16xf32>,
    %cst_23 = arith.constant dense<0.000000e+00> : vector<8x64xf32>
    %61 = tpu.matmul %59, %9, %cst_23 {dimension_numbers = #tpu.dot_dimension_numbers<[1], [0], [0], [1], [0, 0, 1, 1], [], []>} : vector<8x16xf32>, vector<16x64xf32>, vector<8x64xf32> -> vector<8x64xf32>
    %62 = arith.addf %61, %12 : vector<8x64xf32>
    %63 = vector.extract_strided_slice %18 {offsets = [8, 0], sizes = [8, 64], strides = [1, 1]} : vector<64x64xf32> to vector<8x64xf32>
    %cst_24 = arith.constant dense<0.000000e+00> : vector<8x64xf32>
    %64 = tpu.matmul %40, %7, %cst_24 {dimension_numbers = #tpu.dot_dimension_numbers<[1], [0], [0], [1], [0, 0, 1, 1], [], []>} : vector<8x16xf32>, vector<16x64xf32>, vector<8x64xf32> -> vector<8x64xf32>
    %65 = arith.addf %63, %64 : vector<8x64xf32>
    %cst_25 = arith.constant 5.000000e-01 : f32
    %66 = vector.broadcast %cst_25 : f32 to vector<8x64xf32>
    %67 = arith.mulf %66, %65 : vector<8x64xf32>
    %68 = math.tanh %67 : vector<8x64xf32>
    %cst_26 = arith.constant 5.000000e-01 : f32
    %69 = vector.broadcast %cst_26 : f32 to vector<8x64xf32>
    %70 = arith.mulf %69, %68 : vector<8x64xf32>
    %cst_27 = arith.constant 5.000000e-01 : f32
    %71 = vector.broadcast %cst_27 : f32 to vector<8x64xf32>
    %72 = arith.addf %70, %71 : vector<8x64xf32>
    %73 = vector.extract_strided_slice %72 {offsets = [0, 0], sizes = [8, 16], strides = [1, 1]} : vector<8x64xf32> to vector<8x16xf32>
    %74 = vector.extract_strided_slice %72 {offsets = [0, 16], sizes = [8, 16], strides = [1, 1]} : vector<8x64xf32> to vector<8x16xf32>
    %75 = vector.extract_strided_slice %72 {offsets = [0, 48], sizes = [8, 16], strides = [1, 1]} : vector<8x64xf32> to vector<8x16xf32>
    %76 = vector.extract_strided_slice %65 {offsets = [0, 32], sizes = [8, 16], strides = [1, 1]} : vector<8x64xf32> to vector<8x16xf32>
    %77 = math.tanh %76 : vector<8x16xf32>
    %78 = arith.mulf %74, %38 : vector<8x16xf32>
    %79 = arith.mulf %73, %77 : vector<8x16xf32>
    %80 = arith.addf %78, %79 : vector<8x16xf32>
    %81 = math.tanh %80 : vector<8x16xf32>
    %82 = arith.mulf %75, %81 : vector<8x16xf32>
    %cst_28 = arith.constant dense<0.000000e+00> : vector<8x64xf32>
    %83 = tpu.matmul %82, %8, %cst_28 {dimension_numbers = #tpu.dot_dimension_numbers<[1], [0], [0], [1], [0, 0, 1, 1], [], []>} : vector<8x16xf32>, vector<16x64xf32>, vector<8x64xf32> -> vector<8x64xf32>
    %84 = arith.addf %83, %62 : vector<8x64xf32>
    %cst_29 = arith.constant 5.000000e-01 : f32
    %85 = vector.broadcast %cst_29 : f32 to vector<8x64xf32>
    %86 = arith.mulf %85, %84 : vector<8x64xf32>
    %87 = math.tanh %86 : vector<8x64xf32>
    %cst_30 = arith.constant 5.000000e-01 : f32
    %88 = vector.broadcast %cst_30 : f32 to vector<8x64xf32>
    %89 = arith.mulf %88, %87 : vector<8x64xf32>
    %cst_31 = arith.constant 5.000000e-01 : f32
    %90 = vector.broadcast %cst_31 : f32 to vector<8x64xf32>
    %91 = arith.addf %89, %90 : vector<8x64xf32>
    %92 = vector.extract_strided_slice %91 {offsets = [0, 0], sizes = [8, 16], strides = [1, 1]} : vector<8x64xf32> to vector<8x16xf32>
    %93 = vector.extract_strided_slice %91 {offsets = [0, 16], sizes = [8, 16], strides = [1, 1]} : vector<8x64xf32> to vector<8x16xf32>
    %94 = vector.extract_strided_slice %91 {offsets = [0, 48], sizes = [8, 16], strides = [1, 1]} : vector<8x64xf32> to vector<8x16xf32>
    %95 = vector.extract_strided_slice %84 {offsets = [0, 32], sizes = [8, 16], strides = [1, 1]} : vector<8x64xf32> to vector<8x16xf32>
    %96 = math.tanh %95 : vector<8x16xf32>
    %97 = arith.mulf %93, %57 : vector<8x16xf32>
    %98 = arith.mulf %92, %96 : vector<8x16xf32>
    %99 = arith.addf %97, %98 : vector<8x16xf32>
    %100 = math.tanh %99 : vector<8x16xf32>
    %101 = arith.mulf %94, %100 : vector<8x16xf32>
    %c8_32 = arith.constant 8 : index
    %c0_33 = arith.constant 0 : index
    %102 = vector.load %arg5[%c8_32, %c0_33] : memref<64x16xf32, #tpu.memory_space<vmem>>, vector<8x16xf32>
    tpu.vector_store %arg5[%c8_32, %c0_33], %101 {strides = array<i32>} : memref<64x16xf32, #tpu.memory_space<vmem>>, vector<8x16xf32>,
    %cst_34 = arith.constant dense<0.000000e+00> : vector<8x64xf32>
    %103 = tpu.matmul %101, %9, %cst_34 {dimension_numbers = #tpu.dot_dimension_numbers<[1], [0], [0], [1], [0, 0, 1, 1], [], []>} : vector<8x16xf32>, vector<16x64xf32>, vector<8x64xf32> -> vector<8x64xf32>
    %104 = arith.addf %103, %12 : vector<8x64xf32>
    %105 = vector.extract_strided_slice %18 {offsets = [16, 0], sizes = [8, 64], strides = [1, 1]} : vector<64x64xf32> to vector<8x64xf32>
    %cst_35 = arith.constant dense<0.000000e+00> : vector<8x64xf32>
    %106 = tpu.matmul %82, %7, %cst_35 {dimension_numbers = #tpu.dot_dimension_numbers<[1], [0], [0], [1], [0, 0, 1, 1], [], []>} : vector<8x16xf32>, vector<16x64xf32>, vector<8x64xf32> -> vector<8x64xf32>
    %107 = arith.addf %105, %106 : vector<8x64xf32>
    %cst_36 = arith.constant 5.000000e-01 : f32
    %108 = vector.broadcast %cst_36 : f32 to vector<8x64xf32>
    %109 = arith.mulf %108, %107 : vector<8x64xf32>
    %110 = math.tanh %109 : vector<8x64xf32>
    %cst_37 = arith.constant 5.000000e-01 : f32
    %111 = vector.broadcast %cst_37 : f32 to vector<8x64xf32>
    %112 = arith.mulf %111, %110 : vector<8x64xf32>
    %cst_38 = arith.constant 5.000000e-01 : f32
    %113 = vector.broadcast %cst_38 : f32 to vector<8x64xf32>
    %114 = arith.addf %112, %113 : vector<8x64xf32>
    %115 = vector.extract_strided_slice %114 {offsets = [0, 0], sizes = [8, 16], strides = [1, 1]} : vector<8x64xf32> to vector<8x16xf32>
    %116 = vector.extract_strided_slice %114 {offsets = [0, 16], sizes = [8, 16], strides = [1, 1]} : vector<8x64xf32> to vector<8x16xf32>
    %117 = vector.extract_strided_slice %114 {offsets = [0, 48], sizes = [8, 16], strides = [1, 1]} : vector<8x64xf32> to vector<8x16xf32>
    %118 = vector.extract_strided_slice %107 {offsets = [0, 32], sizes = [8, 16], strides = [1, 1]} : vector<8x64xf32> to vector<8x16xf32>
    %119 = math.tanh %118 : vector<8x16xf32>
    %120 = arith.mulf %116, %80 : vector<8x16xf32>
    %121 = arith.mulf %115, %119 : vector<8x16xf32>
    %122 = arith.addf %120, %121 : vector<8x16xf32>
    %123 = math.tanh %122 : vector<8x16xf32>
    %124 = arith.mulf %117, %123 : vector<8x16xf32>
    %cst_39 = arith.constant dense<0.000000e+00> : vector<8x64xf32>
    %125 = tpu.matmul %124, %8, %cst_39 {dimension_numbers = #tpu.dot_dimension_numbers<[1], [0], [0], [1], [0, 0, 1, 1], [], []>} : vector<8x16xf32>, vector<16x64xf32>, vector<8x64xf32> -> vector<8x64xf32>
    %126 = arith.addf %125, %104 : vector<8x64xf32>
    %cst_40 = arith.constant 5.000000e-01 : f32
    %127 = vector.broadcast %cst_40 : f32 to vector<8x64xf32>
    %128 = arith.mulf %127, %126 : vector<8x64xf32>
    %129 = math.tanh %128 : vector<8x64xf32>
    %cst_41 = arith.constant 5.000000e-01 : f32
    %130 = vector.broadcast %cst_41 : f32 to vector<8x64xf32>
    %131 = arith.mulf %130, %129 : vector<8x64xf32>
    %cst_42 = arith.constant 5.000000e-01 : f32
    %132 = vector.broadcast %cst_42 : f32 to vector<8x64xf32>
    %133 = arith.addf %131, %132 : vector<8x64xf32>
    %134 = vector.extract_strided_slice %133 {offsets = [0, 0], sizes = [8, 16], strides = [1, 1]} : vector<8x64xf32> to vector<8x16xf32>
    %135 = vector.extract_strided_slice %133 {offsets = [0, 16], sizes = [8, 16], strides = [1, 1]} : vector<8x64xf32> to vector<8x16xf32>
    %136 = vector.extract_strided_slice %133 {offsets = [0, 48], sizes = [8, 16], strides = [1, 1]} : vector<8x64xf32> to vector<8x16xf32>
    %137 = vector.extract_strided_slice %126 {offsets = [0, 32], sizes = [8, 16], strides = [1, 1]} : vector<8x64xf32> to vector<8x16xf32>
    %138 = math.tanh %137 : vector<8x16xf32>
    %139 = arith.mulf %135, %99 : vector<8x16xf32>
    %140 = arith.mulf %134, %138 : vector<8x16xf32>
    %141 = arith.addf %139, %140 : vector<8x16xf32>
    %142 = math.tanh %141 : vector<8x16xf32>
    %143 = arith.mulf %136, %142 : vector<8x16xf32>
    %c16_43 = arith.constant 16 : index
    %c0_44 = arith.constant 0 : index
    %144 = vector.load %arg5[%c16_43, %c0_44] : memref<64x16xf32, #tpu.memory_space<vmem>>, vector<8x16xf32>
    tpu.vector_store %arg5[%c16_43, %c0_44], %143 {strides = array<i32>} : memref<64x16xf32, #tpu.memory_space<vmem>>, vector<8x16xf32>,
    %cst_45 = arith.constant dense<0.000000e+00> : vector<8x64xf32>
    %145 = tpu.matmul %143, %9, %cst_45 {dimension_numbers = #tpu.dot_dimension_numbers<[1], [0], [0], [1], [0, 0, 1, 1], [], []>} : vector<8x16xf32>, vector<16x64xf32>, vector<8x64xf32> -> vector<8x64xf32>
    %146 = arith.addf %145, %12 : vector<8x64xf32>
    %147 = vector.extract_strided_slice %18 {offsets = [24, 0], sizes = [8, 64], strides = [1, 1]} : vector<64x64xf32> to vector<8x64xf32>
    %cst_46 = arith.constant dense<0.000000e+00> : vector<8x64xf32>
    %148 = tpu.matmul %124, %7, %cst_46 {dimension_numbers = #tpu.dot_dimension_numbers<[1], [0], [0], [1], [0, 0, 1, 1], [], []>} : vector<8x16xf32>, vector<16x64xf32>, vector<8x64xf32> -> vector<8x64xf32>
    %149 = arith.addf %147, %148 : vector<8x64xf32>
    %cst_47 = arith.constant 5.000000e-01 : f32
    %150 = vector.broadcast %cst_47 : f32 to vector<8x64xf32>
    %151 = arith.mulf %150, %149 : vector<8x64xf32>
    %152 = math.tanh %151 : vector<8x64xf32>
    %cst_48 = arith.constant 5.000000e-01 : f32
    %153 = vector.broadcast %cst_48 : f32 to vector<8x64xf32>
    %154 = arith.mulf %153, %152 : vector<8x64xf32>
    %cst_49 = arith.constant 5.000000e-01 : f32
    %155 = vector.broadcast %cst_49 : f32 to vector<8x64xf32>
    %156 = arith.addf %154, %155 : vector<8x64xf32>
    %157 = vector.extract_strided_slice %156 {offsets = [0, 0], sizes = [8, 16], strides = [1, 1]} : vector<8x64xf32> to vector<8x16xf32>
    %158 = vector.extract_strided_slice %156 {offsets = [0, 16], sizes = [8, 16], strides = [1, 1]} : vector<8x64xf32> to vector<8x16xf32>
    %159 = vector.extract_strided_slice %156 {offsets = [0, 48], sizes = [8, 16], strides = [1, 1]} : vector<8x64xf32> to vector<8x16xf32>
    %160 = vector.extract_strided_slice %149 {offsets = [0, 32], sizes = [8, 16], strides = [1, 1]} : vector<8x64xf32> to vector<8x16xf32>
    %161 = math.tanh %160 : vector<8x16xf32>
    %162 = arith.mulf %158, %122 : vector<8x16xf32>
    %163 = arith.mulf %157, %161 : vector<8x16xf32>
    %164 = arith.addf %162, %163 : vector<8x16xf32>
    %165 = math.tanh %164 : vector<8x16xf32>
    %166 = arith.mulf %159, %165 : vector<8x16xf32>
    %cst_50 = arith.constant dense<0.000000e+00> : vector<8x64xf32>
    %167 = tpu.matmul %166, %8, %cst_50 {dimension_numbers = #tpu.dot_dimension_numbers<[1], [0], [0], [1], [0, 0, 1, 1], [], []>} : vector<8x16xf32>, vector<16x64xf32>, vector<8x64xf32> -> vector<8x64xf32>
    %168 = arith.addf %167, %146 : vector<8x64xf32>
    %cst_51 = arith.constant 5.000000e-01 : f32
    %169 = vector.broadcast %cst_51 : f32 to vector<8x64xf32>
    %170 = arith.mulf %169, %168 : vector<8x64xf32>
    %171 = math.tanh %170 : vector<8x64xf32>
    %cst_52 = arith.constant 5.000000e-01 : f32
    %172 = vector.broadcast %cst_52 : f32 to vector<8x64xf32>
    %173 = arith.mulf %172, %171 : vector<8x64xf32>
    %cst_53 = arith.constant 5.000000e-01 : f32
    %174 = vector.broadcast %cst_53 : f32 to vector<8x64xf32>
    %175 = arith.addf %173, %174 : vector<8x64xf32>
    %176 = vector.extract_strided_slice %175 {offsets = [0, 0], sizes = [8, 16], strides = [1, 1]} : vector<8x64xf32> to vector<8x16xf32>
    %177 = vector.extract_strided_slice %175 {offsets = [0, 16], sizes = [8, 16], strides = [1, 1]} : vector<8x64xf32> to vector<8x16xf32>
    %178 = vector.extract_strided_slice %175 {offsets = [0, 48], sizes = [8, 16], strides = [1, 1]} : vector<8x64xf32> to vector<8x16xf32>
    %179 = vector.extract_strided_slice %168 {offsets = [0, 32], sizes = [8, 16], strides = [1, 1]} : vector<8x64xf32> to vector<8x16xf32>
    %180 = math.tanh %179 : vector<8x16xf32>
    %181 = arith.mulf %177, %141 : vector<8x16xf32>
    %182 = arith.mulf %176, %180 : vector<8x16xf32>
    %183 = arith.addf %181, %182 : vector<8x16xf32>
    %184 = math.tanh %183 : vector<8x16xf32>
    %185 = arith.mulf %178, %184 : vector<8x16xf32>
    %c24 = arith.constant 24 : index
    %c0_54 = arith.constant 0 : index
    %186 = vector.load %arg5[%c24, %c0_54] : memref<64x16xf32, #tpu.memory_space<vmem>>, vector<8x16xf32>
    tpu.vector_store %arg5[%c24, %c0_54], %185 {strides = array<i32>} : memref<64x16xf32, #tpu.memory_space<vmem>>, vector<8x16xf32>,
    %cst_55 = arith.constant dense<0.000000e+00> : vector<8x64xf32>
    %187 = tpu.matmul %185, %9, %cst_55 {dimension_numbers = #tpu.dot_dimension_numbers<[1], [0], [0], [1], [0, 0, 1, 1], [], []>} : vector<8x16xf32>, vector<16x64xf32>, vector<8x64xf32> -> vector<8x64xf32>
    %188 = arith.addf %187, %12 : vector<8x64xf32>
    %189 = vector.extract_strided_slice %18 {offsets = [32, 0], sizes = [8, 64], strides = [1, 1]} : vector<64x64xf32> to vector<8x64xf32>
    %cst_56 = arith.constant dense<0.000000e+00> : vector<8x64xf32>
    %190 = tpu.matmul %166, %7, %cst_56 {dimension_numbers = #tpu.dot_dimension_numbers<[1], [0], [0], [1], [0, 0, 1, 1], [], []>} : vector<8x16xf32>, vector<16x64xf32>, vector<8x64xf32> -> vector<8x64xf32>
    %191 = arith.addf %189, %190 : vector<8x64xf32>
    %cst_57 = arith.constant 5.000000e-01 : f32
    %192 = vector.broadcast %cst_57 : f32 to vector<8x64xf32>
    %193 = arith.mulf %192, %191 : vector<8x64xf32>
    %194 = math.tanh %193 : vector<8x64xf32>
    %cst_58 = arith.constant 5.000000e-01 : f32
    %195 = vector.broadcast %cst_58 : f32 to vector<8x64xf32>
    %196 = arith.mulf %195, %194 : vector<8x64xf32>
    %cst_59 = arith.constant 5.000000e-01 : f32
    %197 = vector.broadcast %cst_59 : f32 to vector<8x64xf32>
    %198 = arith.addf %196, %197 : vector<8x64xf32>
    %199 = vector.extract_strided_slice %198 {offsets = [0, 0], sizes = [8, 16], strides = [1, 1]} : vector<8x64xf32> to vector<8x16xf32>
    %200 = vector.extract_strided_slice %198 {offsets = [0, 16], sizes = [8, 16], strides = [1, 1]} : vector<8x64xf32> to vector<8x16xf32>
    %201 = vector.extract_strided_slice %198 {offsets = [0, 48], sizes = [8, 16], strides = [1, 1]} : vector<8x64xf32> to vector<8x16xf32>
    %202 = vector.extract_strided_slice %191 {offsets = [0, 32], sizes = [8, 16], strides = [1, 1]} : vector<8x64xf32> to vector<8x16xf32>
    %203 = math.tanh %202 : vector<8x16xf32>
    %204 = arith.mulf %200, %164 : vector<8x16xf32>
    %205 = arith.mulf %199, %203 : vector<8x16xf32>
    %206 = arith.addf %204, %205 : vector<8x16xf32>
    %207 = math.tanh %206 : vector<8x16xf32>
    %208 = arith.mulf %201, %207 : vector<8x16xf32>
    %cst_60 = arith.constant dense<0.000000e+00> : vector<8x64xf32>
    %209 = tpu.matmul %208, %8, %cst_60 {dimension_numbers = #tpu.dot_dimension_numbers<[1], [0], [0], [1], [0, 0, 1, 1], [], []>} : vector<8x16xf32>, vector<16x64xf32>, vector<8x64xf32> -> vector<8x64xf32>
    %210 = arith.addf %209, %188 : vector<8x64xf32>
    %cst_61 = arith.constant 5.000000e-01 : f32
    %211 = vector.broadcast %cst_61 : f32 to vector<8x64xf32>
    %212 = arith.mulf %211, %210 : vector<8x64xf32>
    %213 = math.tanh %212 : vector<8x64xf32>
    %cst_62 = arith.constant 5.000000e-01 : f32
    %214 = vector.broadcast %cst_62 : f32 to vector<8x64xf32>
    %215 = arith.mulf %214, %213 : vector<8x64xf32>
    %cst_63 = arith.constant 5.000000e-01 : f32
    %216 = vector.broadcast %cst_63 : f32 to vector<8x64xf32>
    %217 = arith.addf %215, %216 : vector<8x64xf32>
    %218 = vector.extract_strided_slice %217 {offsets = [0, 0], sizes = [8, 16], strides = [1, 1]} : vector<8x64xf32> to vector<8x16xf32>
    %219 = vector.extract_strided_slice %217 {offsets = [0, 16], sizes = [8, 16], strides = [1, 1]} : vector<8x64xf32> to vector<8x16xf32>
    %220 = vector.extract_strided_slice %217 {offsets = [0, 48], sizes = [8, 16], strides = [1, 1]} : vector<8x64xf32> to vector<8x16xf32>
    %221 = vector.extract_strided_slice %210 {offsets = [0, 32], sizes = [8, 16], strides = [1, 1]} : vector<8x64xf32> to vector<8x16xf32>
    %222 = math.tanh %221 : vector<8x16xf32>
    %223 = arith.mulf %219, %183 : vector<8x16xf32>
    %224 = arith.mulf %218, %222 : vector<8x16xf32>
    %225 = arith.addf %223, %224 : vector<8x16xf32>
    %226 = math.tanh %225 : vector<8x16xf32>
    %227 = arith.mulf %220, %226 : vector<8x16xf32>
    %c32_64 = arith.constant 32 : index
    %c0_65 = arith.constant 0 : index
    %228 = vector.load %arg5[%c32_64, %c0_65] : memref<64x16xf32, #tpu.memory_space<vmem>>, vector<8x16xf32>
    tpu.vector_store %arg5[%c32_64, %c0_65], %227 {strides = array<i32>} : memref<64x16xf32, #tpu.memory_space<vmem>>, vector<8x16xf32>,
    %cst_66 = arith.constant dense<0.000000e+00> : vector<8x64xf32>
    %229 = tpu.matmul %227, %9, %cst_66 {dimension_numbers = #tpu.dot_dimension_numbers<[1], [0], [0], [1], [0, 0, 1, 1], [], []>} : vector<8x16xf32>, vector<16x64xf32>, vector<8x64xf32> -> vector<8x64xf32>
    %230 = arith.addf %229, %12 : vector<8x64xf32>
    %231 = vector.extract_strided_slice %18 {offsets = [40, 0], sizes = [8, 64], strides = [1, 1]} : vector<64x64xf32> to vector<8x64xf32>
    %cst_67 = arith.constant dense<0.000000e+00> : vector<8x64xf32>
    %232 = tpu.matmul %208, %7, %cst_67 {dimension_numbers = #tpu.dot_dimension_numbers<[1], [0], [0], [1], [0, 0, 1, 1], [], []>} : vector<8x16xf32>, vector<16x64xf32>, vector<8x64xf32> -> vector<8x64xf32>
    %233 = arith.addf %231, %232 : vector<8x64xf32>
    %cst_68 = arith.constant 5.000000e-01 : f32
    %234 = vector.broadcast %cst_68 : f32 to vector<8x64xf32>
    %235 = arith.mulf %234, %233 : vector<8x64xf32>
    %236 = math.tanh %235 : vector<8x64xf32>
    %cst_69 = arith.constant 5.000000e-01 : f32
    %237 = vector.broadcast %cst_69 : f32 to vector<8x64xf32>
    %238 = arith.mulf %237, %236 : vector<8x64xf32>
    %cst_70 = arith.constant 5.000000e-01 : f32
    %239 = vector.broadcast %cst_70 : f32 to vector<8x64xf32>
    %240 = arith.addf %238, %239 : vector<8x64xf32>
    %241 = vector.extract_strided_slice %240 {offsets = [0, 0], sizes = [8, 16], strides = [1, 1]} : vector<8x64xf32> to vector<8x16xf32>
    %242 = vector.extract_strided_slice %240 {offsets = [0, 16], sizes = [8, 16], strides = [1, 1]} : vector<8x64xf32> to vector<8x16xf32>
    %243 = vector.extract_strided_slice %240 {offsets = [0, 48], sizes = [8, 16], strides = [1, 1]} : vector<8x64xf32> to vector<8x16xf32>
    %244 = vector.extract_strided_slice %233 {offsets = [0, 32], sizes = [8, 16], strides = [1, 1]} : vector<8x64xf32> to vector<8x16xf32>
    %245 = math.tanh %244 : vector<8x16xf32>
    %246 = arith.mulf %242, %206 : vector<8x16xf32>
    %247 = arith.mulf %241, %245 : vector<8x16xf32>
    %248 = arith.addf %246, %247 : vector<8x16xf32>
    %249 = math.tanh %248 : vector<8x16xf32>
    %250 = arith.mulf %243, %249 : vector<8x16xf32>
    %cst_71 = arith.constant dense<0.000000e+00> : vector<8x64xf32>
    %251 = tpu.matmul %250, %8, %cst_71 {dimension_numbers = #tpu.dot_dimension_numbers<[1], [0], [0], [1], [0, 0, 1, 1], [], []>} : vector<8x16xf32>, vector<16x64xf32>, vector<8x64xf32> -> vector<8x64xf32>
    %252 = arith.addf %251, %230 : vector<8x64xf32>
    %cst_72 = arith.constant 5.000000e-01 : f32
    %253 = vector.broadcast %cst_72 : f32 to vector<8x64xf32>
    %254 = arith.mulf %253, %252 : vector<8x64xf32>
    %255 = math.tanh %254 : vector<8x64xf32>
    %cst_73 = arith.constant 5.000000e-01 : f32
    %256 = vector.broadcast %cst_73 : f32 to vector<8x64xf32>
    %257 = arith.mulf %256, %255 : vector<8x64xf32>
    %cst_74 = arith.constant 5.000000e-01 : f32
    %258 = vector.broadcast %cst_74 : f32 to vector<8x64xf32>
    %259 = arith.addf %257, %258 : vector<8x64xf32>
    %260 = vector.extract_strided_slice %259 {offsets = [0, 0], sizes = [8, 16], strides = [1, 1]} : vector<8x64xf32> to vector<8x16xf32>
    %261 = vector.extract_strided_slice %259 {offsets = [0, 16], sizes = [8, 16], strides = [1, 1]} : vector<8x64xf32> to vector<8x16xf32>
    %262 = vector.extract_strided_slice %259 {offsets = [0, 48], sizes = [8, 16], strides = [1, 1]} : vector<8x64xf32> to vector<8x16xf32>
    %263 = vector.extract_strided_slice %252 {offsets = [0, 32], sizes = [8, 16], strides = [1, 1]} : vector<8x64xf32> to vector<8x16xf32>
    %264 = math.tanh %263 : vector<8x16xf32>
    %265 = arith.mulf %261, %225 : vector<8x16xf32>
    %266 = arith.mulf %260, %264 : vector<8x16xf32>
    %267 = arith.addf %265, %266 : vector<8x16xf32>
    %268 = math.tanh %267 : vector<8x16xf32>
    %269 = arith.mulf %262, %268 : vector<8x16xf32>
    %c40 = arith.constant 40 : index
    %c0_75 = arith.constant 0 : index
    %270 = vector.load %arg5[%c40, %c0_75] : memref<64x16xf32, #tpu.memory_space<vmem>>, vector<8x16xf32>
    tpu.vector_store %arg5[%c40, %c0_75], %269 {strides = array<i32>} : memref<64x16xf32, #tpu.memory_space<vmem>>, vector<8x16xf32>,
    %cst_76 = arith.constant dense<0.000000e+00> : vector<8x64xf32>
    %271 = tpu.matmul %269, %9, %cst_76 {dimension_numbers = #tpu.dot_dimension_numbers<[1], [0], [0], [1], [0, 0, 1, 1], [], []>} : vector<8x16xf32>, vector<16x64xf32>, vector<8x64xf32> -> vector<8x64xf32>
    %272 = arith.addf %271, %12 : vector<8x64xf32>
    %273 = vector.extract_strided_slice %18 {offsets = [48, 0], sizes = [8, 64], strides = [1, 1]} : vector<64x64xf32> to vector<8x64xf32>
    %cst_77 = arith.constant dense<0.000000e+00> : vector<8x64xf32>
    %274 = tpu.matmul %250, %7, %cst_77 {dimension_numbers = #tpu.dot_dimension_numbers<[1], [0], [0], [1], [0, 0, 1, 1], [], []>} : vector<8x16xf32>, vector<16x64xf32>, vector<8x64xf32> -> vector<8x64xf32>
    %275 = arith.addf %273, %274 : vector<8x64xf32>
    %cst_78 = arith.constant 5.000000e-01 : f32
    %276 = vector.broadcast %cst_78 : f32 to vector<8x64xf32>
    %277 = arith.mulf %276, %275 : vector<8x64xf32>
    %278 = math.tanh %277 : vector<8x64xf32>
    %cst_79 = arith.constant 5.000000e-01 : f32
    %279 = vector.broadcast %cst_79 : f32 to vector<8x64xf32>
    %280 = arith.mulf %279, %278 : vector<8x64xf32>
    %cst_80 = arith.constant 5.000000e-01 : f32
    %281 = vector.broadcast %cst_80 : f32 to vector<8x64xf32>
    %282 = arith.addf %280, %281 : vector<8x64xf32>
    %283 = vector.extract_strided_slice %282 {offsets = [0, 0], sizes = [8, 16], strides = [1, 1]} : vector<8x64xf32> to vector<8x16xf32>
    %284 = vector.extract_strided_slice %282 {offsets = [0, 16], sizes = [8, 16], strides = [1, 1]} : vector<8x64xf32> to vector<8x16xf32>
    %285 = vector.extract_strided_slice %282 {offsets = [0, 48], sizes = [8, 16], strides = [1, 1]} : vector<8x64xf32> to vector<8x16xf32>
    %286 = vector.extract_strided_slice %275 {offsets = [0, 32], sizes = [8, 16], strides = [1, 1]} : vector<8x64xf32> to vector<8x16xf32>
    %287 = math.tanh %286 : vector<8x16xf32>
    %288 = arith.mulf %284, %248 : vector<8x16xf32>
    %289 = arith.mulf %283, %287 : vector<8x16xf32>
    %290 = arith.addf %288, %289 : vector<8x16xf32>
    %291 = math.tanh %290 : vector<8x16xf32>
    %292 = arith.mulf %285, %291 : vector<8x16xf32>
    %cst_81 = arith.constant dense<0.000000e+00> : vector<8x64xf32>
    %293 = tpu.matmul %292, %8, %cst_81 {dimension_numbers = #tpu.dot_dimension_numbers<[1], [0], [0], [1], [0, 0, 1, 1], [], []>} : vector<8x16xf32>, vector<16x64xf32>, vector<8x64xf32> -> vector<8x64xf32>
    %294 = arith.addf %293, %272 : vector<8x64xf32>
    %cst_82 = arith.constant 5.000000e-01 : f32
    %295 = vector.broadcast %cst_82 : f32 to vector<8x64xf32>
    %296 = arith.mulf %295, %294 : vector<8x64xf32>
    %297 = math.tanh %296 : vector<8x64xf32>
    %cst_83 = arith.constant 5.000000e-01 : f32
    %298 = vector.broadcast %cst_83 : f32 to vector<8x64xf32>
    %299 = arith.mulf %298, %297 : vector<8x64xf32>
    %cst_84 = arith.constant 5.000000e-01 : f32
    %300 = vector.broadcast %cst_84 : f32 to vector<8x64xf32>
    %301 = arith.addf %299, %300 : vector<8x64xf32>
    %302 = vector.extract_strided_slice %301 {offsets = [0, 0], sizes = [8, 16], strides = [1, 1]} : vector<8x64xf32> to vector<8x16xf32>
    %303 = vector.extract_strided_slice %301 {offsets = [0, 16], sizes = [8, 16], strides = [1, 1]} : vector<8x64xf32> to vector<8x16xf32>
    %304 = vector.extract_strided_slice %301 {offsets = [0, 48], sizes = [8, 16], strides = [1, 1]} : vector<8x64xf32> to vector<8x16xf32>
    %305 = vector.extract_strided_slice %294 {offsets = [0, 32], sizes = [8, 16], strides = [1, 1]} : vector<8x64xf32> to vector<8x16xf32>
    %306 = math.tanh %305 : vector<8x16xf32>
    %307 = arith.mulf %303, %267 : vector<8x16xf32>
    %308 = arith.mulf %302, %306 : vector<8x16xf32>
    %309 = arith.addf %307, %308 : vector<8x16xf32>
    %310 = math.tanh %309 : vector<8x16xf32>
    %311 = arith.mulf %304, %310 : vector<8x16xf32>
    %c48_85 = arith.constant 48 : index
    %c0_86 = arith.constant 0 : index
    %312 = vector.load %arg5[%c48_85, %c0_86] : memref<64x16xf32, #tpu.memory_space<vmem>>, vector<8x16xf32>
    tpu.vector_store %arg5[%c48_85, %c0_86], %311 {strides = array<i32>} : memref<64x16xf32, #tpu.memory_space<vmem>>, vector<8x16xf32>,
    %cst_87 = arith.constant dense<0.000000e+00> : vector<8x64xf32>
    %313 = tpu.matmul %311, %9, %cst_87 {dimension_numbers = #tpu.dot_dimension_numbers<[1], [0], [0], [1], [0, 0, 1, 1], [], []>} : vector<8x16xf32>, vector<16x64xf32>, vector<8x64xf32> -> vector<8x64xf32>
    %314 = arith.addf %313, %12 : vector<8x64xf32>
    %315 = vector.extract_strided_slice %18 {offsets = [56, 0], sizes = [8, 64], strides = [1, 1]} : vector<64x64xf32> to vector<8x64xf32>
    %cst_88 = arith.constant dense<0.000000e+00> : vector<8x64xf32>
    %316 = tpu.matmul %292, %7, %cst_88 {dimension_numbers = #tpu.dot_dimension_numbers<[1], [0], [0], [1], [0, 0, 1, 1], [], []>} : vector<8x16xf32>, vector<16x64xf32>, vector<8x64xf32> -> vector<8x64xf32>
    %317 = arith.addf %315, %316 : vector<8x64xf32>
    %cst_89 = arith.constant 5.000000e-01 : f32
    %318 = vector.broadcast %cst_89 : f32 to vector<8x64xf32>
    %319 = arith.mulf %318, %317 : vector<8x64xf32>
    %320 = math.tanh %319 : vector<8x64xf32>
    %cst_90 = arith.constant 5.000000e-01 : f32
    %321 = vector.broadcast %cst_90 : f32 to vector<8x64xf32>
    %322 = arith.mulf %321, %320 : vector<8x64xf32>
    %cst_91 = arith.constant 5.000000e-01 : f32
    %323 = vector.broadcast %cst_91 : f32 to vector<8x64xf32>
    %324 = arith.addf %322, %323 : vector<8x64xf32>
    %325 = vector.extract_strided_slice %324 {offsets = [0, 0], sizes = [8, 16], strides = [1, 1]} : vector<8x64xf32> to vector<8x16xf32>
    %326 = vector.extract_strided_slice %324 {offsets = [0, 16], sizes = [8, 16], strides = [1, 1]} : vector<8x64xf32> to vector<8x16xf32>
    %327 = vector.extract_strided_slice %324 {offsets = [0, 48], sizes = [8, 16], strides = [1, 1]} : vector<8x64xf32> to vector<8x16xf32>
    %328 = vector.extract_strided_slice %317 {offsets = [0, 32], sizes = [8, 16], strides = [1, 1]} : vector<8x64xf32> to vector<8x16xf32>
    %329 = math.tanh %328 : vector<8x16xf32>
    %330 = arith.mulf %326, %290 : vector<8x16xf32>
    %331 = arith.mulf %325, %329 : vector<8x16xf32>
    %332 = arith.addf %330, %331 : vector<8x16xf32>
    %333 = math.tanh %332 : vector<8x16xf32>
    %334 = arith.mulf %327, %333 : vector<8x16xf32>
    %cst_92 = arith.constant dense<0.000000e+00> : vector<8x64xf32>
    %335 = tpu.matmul %334, %8, %cst_92 {dimension_numbers = #tpu.dot_dimension_numbers<[1], [0], [0], [1], [0, 0, 1, 1], [], []>} : vector<8x16xf32>, vector<16x64xf32>, vector<8x64xf32> -> vector<8x64xf32>
    %336 = arith.addf %335, %314 : vector<8x64xf32>
    %cst_93 = arith.constant 5.000000e-01 : f32
    %337 = vector.broadcast %cst_93 : f32 to vector<8x64xf32>
    %338 = arith.mulf %337, %336 : vector<8x64xf32>
    %339 = math.tanh %338 : vector<8x64xf32>
    %cst_94 = arith.constant 5.000000e-01 : f32
    %340 = vector.broadcast %cst_94 : f32 to vector<8x64xf32>
    %341 = arith.mulf %340, %339 : vector<8x64xf32>
    %cst_95 = arith.constant 5.000000e-01 : f32
    %342 = vector.broadcast %cst_95 : f32 to vector<8x64xf32>
    %343 = arith.addf %341, %342 : vector<8x64xf32>
    %344 = vector.extract_strided_slice %343 {offsets = [0, 0], sizes = [8, 16], strides = [1, 1]} : vector<8x64xf32> to vector<8x16xf32>
    %345 = vector.extract_strided_slice %343 {offsets = [0, 16], sizes = [8, 16], strides = [1, 1]} : vector<8x64xf32> to vector<8x16xf32>
    %346 = vector.extract_strided_slice %343 {offsets = [0, 48], sizes = [8, 16], strides = [1, 1]} : vector<8x64xf32> to vector<8x16xf32>
    %347 = vector.extract_strided_slice %336 {offsets = [0, 32], sizes = [8, 16], strides = [1, 1]} : vector<8x64xf32> to vector<8x16xf32>
    %348 = math.tanh %347 : vector<8x16xf32>
    %349 = arith.mulf %345, %309 : vector<8x16xf32>
    %350 = arith.mulf %344, %348 : vector<8x16xf32>
    %351 = arith.addf %349, %350 : vector<8x16xf32>
    %352 = math.tanh %351 : vector<8x16xf32>
    %353 = arith.mulf %346, %352 : vector<8x16xf32>
    %c56 = arith.constant 56 : index
    %c0_96 = arith.constant 0 : index
    %354 = vector.load %arg5[%c56, %c0_96] : memref<64x16xf32, #tpu.memory_space<vmem>>, vector<8x16xf32>
    tpu.vector_store %arg5[%c56, %c0_96], %353 {strides = array<i32>} : memref<64x16xf32, #tpu.memory_space<vmem>>, vector<8x16xf32>,
    %c0_97 = arith.constant 0 : index
    %c0_98 = arith.constant 0 : index
    %355 = vector.load %arg5[%c0_97, %c0_98] : memref<64x16xf32, #tpu.memory_space<vmem>>, vector<64x16xf32>
    %cst_99 = arith.constant dense<0.000000e+00> : vector<64x128xf32>
    %356 = tpu.matmul %355, %13, %cst_99 {dimension_numbers = #tpu.dot_dimension_numbers<[1], [0], [0], [1], [0, 0, 1, 1], [], []>} : vector<64x16xf32>, vector<16x128xf32>, vector<64x128xf32> -> vector<64x128xf32>
    %357 = vector.broadcast %14 : vector<1x128xf32> to vector<64x128xf32>
    %358 = arith.addf %356, %357 : vector<64x128xf32>
    %c0_100 = arith.constant 0 : index
    %c0_101 = arith.constant 0 : index
    %359 = vector.load %arg3[%c0_100, %c0_101] : memref<64x128xf32, #tpu.memory_space<vmem>>, vector<64x128xf32>
    tpu.vector_store %arg3[%c0_100, %c0_101], %358 {strides = array<i32>} : memref<64x128xf32, #tpu.memory_space<vmem>>, vector<64x128xf32>,
    %360 = tpu.concatenate %334, %332, %353, %351 in 1 : vector<8x16xf32>, vector<8x16xf32>, vector<8x16xf32>, vector<8x16xf32> -> vector<8x64xf32>
    %c0_102 = arith.constant 0 : index
    %c0_103 = arith.constant 0 : index
    %361 = vector.load %arg4[%c0_102, %c0_103] : memref<8x64xf32, #tpu.memory_space<vmem>>, vector<8x64xf32>
    tpu.vector_store %arg4[%c0_102, %c0_103], %360 {strides = array<i32>} : memref<8x64xf32, #tpu.memory_space<vmem>>, vector<8x64xf32>,
    return
  }
}

</mosaic_0001>

<llo_original>
// kernel: multi_regression_lstm.1
$region0: #{multi_regression_lstm.1}
  #allocation0 [shape = 'u32[]', space=smem, size = 0x4, offset = 0x4, fixed_abs, tag = 'smem constant byte address 0x4 - core index']
  #allocation1 [shape = 'u32[72,128]{1,0:T(1,128)}', space=vmem, size = 0x9000, scoped, tag = 'internal scratch']
  #allocation2 [shape = 'f32[64,16]{1,0:T(8,128)}', space=vmem, size = 0x8000, scoped, tag = 'scratch operand']
  %s0 = inlined_call_operand.vmem [shape: f32[64,6], index: 0, kind: input, shape index: {}]
  %s1 = inlined_call_operand.vmem [shape: f32[8,64], index: 1, kind: input, shape index: {}]
  %s2 = inlined_call_operand.vmem [shape: f32[96,128], index: 2, kind: input, shape index: {}]
  %s3 = inlined_call_operand.vmem [shape: f32[64,128], index: 3, kind: output, shape index: {0}]
  %s4 = inlined_call_operand.vmem [shape: f32[8,64], index: 4, kind: output, shape index: {1}]
  %5 = xla_tuple %s3, %s4
  %s6 = sld [smem:[#allocation0]]
  $region30: #{multi_regression_lstm.1} parent=0
    _
  %s8 = ssub.s32 1, %s6
  %s9 = scalar_select 0, %s8, %s6
  // Predicated region
  $region2: #{multi_regression_lstm.1} parent=0 // pred_check
    _
  $region3: #{multi_regression_lstm.1} parent=0 // pred_check_branch
    %11 = sbr.rel (0) target = $region5
  $region4: #{multi_regression_lstm.1} parent=0 // pred_region
    _
  $region5: #{multi_regression_lstm.1} parent=0 // pred_fallthru
    _
  // Predicated region
  $region6: #{multi_regression_lstm.1} parent=0 // pred_check
    _
  $region7: #{multi_regression_lstm.1} parent=0 // pred_check_branch
    %13 = sbr.rel (0) target = $region9
  $region8: #{multi_regression_lstm.1} parent=0 // pred_region
    _
  $region9: #{multi_regression_lstm.1} parent=0 // pred_fallthru
    _
  // Predicated region
  $region10: #{multi_regression_lstm.1} parent=0 // pred_check
    _
  $region11: #{multi_regression_lstm.1} parent=0 // pred_check_branch
    %15 = sbr.rel (0) target = $region13
  $region12: #{multi_regression_lstm.1} parent=0 // pred_region
    _
  $region13: #{multi_regression_lstm.1} parent=0 // pred_fallthru
    _
  %v16 = vld [vmem:[%s1] sm:$0xff]
  %v17 = vld [vmem:[%s2] sm:$0x3f]
  %v18 = vld [vmem:[%s2 + $0x8] sm:$0x1]
  %v19 = vld [vmem:[%s2 + $0x10] sm:$0xff]
  %v20 = vld [vmem:[%s2 + $0x18] sm:$0xff]
  %v21 = vld [vmem:[%s2 + $0x20] sm:$0xff]
  %v22 = vld [vmem:[%s2 + $0x28] sm:$0xff]
  %v23 = vld [vmem:[%s2 + $0x30] sm:$0xff]
  %v24 = vld [vmem:[%s2 + $0x38] sm:$0xff]
  %v25 = vld [vmem:[%s2 + $0x40] sm:$0x1]
  %v26 = vperm.slane %v25, 0
  %v27 = vld [vmem:[%s2 + $0x48] sm:$0xff]
  %v28 = vld [vmem:[%s2 + $0x50] sm:$0xff]
  %v29 = vld [vmem:[%s2 + $0x58] sm:$0x1]
  %v30 = vld [vmem:[%s0] sm:$0xff]
  %v31 = vld [vmem:[%s0 + $0x8] sm:$0xff]
  %v32 = vld [vmem:[%s0 + $0x10] sm:$0xff]
  %v33 = vld [vmem:[%s0 + $0x18] sm:$0xff]
  %v34 = vld [vmem:[%s0 + $0x20] sm:$0xff]
  %v35 = vld [vmem:[%s0 + $0x28] sm:$0xff]
  %v36 = vld [vmem:[%s0 + $0x30] sm:$0xff]
  %v37 = vld [vmem:[%s0 + $0x38] sm:$0xff]
  %v38 = vperm.slane %v18, 0
  %vm39 = vcmask 48128
  %v41 = vsel %vm39, %v30, 0
  %v44 = vsel %vm39, %v31, 0
  %v47 = vsel %vm39, %v32, 0
  %v50 = vsel %vm39, %v33, 0
  %v53 = vsel %vm39, %v34, 0
  %v56 = vsel %vm39, %v35, 0
  %v59 = vsel %vm39, %v36, 0
  %v62 = vsel %vm39, %v37, 0
  %vm64 = vcmask 1045504
  %v66 = vsel %vm64, %v17, 0
  %68 = vmatpush.msra.mxu0 0.0
  %69 = vmatpush.msra.mxu0 0.0
  %70 = vmatpush.msra.mxu0 0.0
  %71 = vmatpush.msra.mxu0 0.0
  %72 = vmatpush.msra.mxu0 0.0
  %73 = vmatpush.msra.mxu0 0.0
  %74 = vmatpush.msra.mxu0 0.0
  %75 = vmatpush.msra.mxu0 0.0
  %76 = vmatpush.msra.mxu0 0.0
  %77 = vmatpush.msra.mxu0 0.0
  %78 = vmatpush.msra.mxu0 0.0
  %79 = vmatpush.msra.mxu0 0.0
  %80 = vmatpush.msra.mxu0 0.0
  %81 = vmatpush.msra.mxu0 0.0
  %82 = vmatpush.msra.mxu0 0.0
  %83 = vmatpush.msra.mxu0 %v66
  %84 = vmatmul.f32.gmra.mxu0 %v41
  %v85 = vpop.f32.mrf.mxu0
  %v86 = vadd.f32 %v38, %v85
  %87 = vmatmul.f32.gmra.mxu0 %v44
  %v88 = vpop.f32.mrf.mxu0
  %v89 = vadd.f32 %v38, %v88
  %90 = vmatmul.f32.gmra.mxu0 %v47
  %v91 = vpop.f32.mrf.mxu0
  %v92 = vadd.f32 %v38, %v91
  %93 = vmatmul.f32.gmra.mxu0 %v50
  %v94 = vpop.f32.mrf.mxu0
  %v95 = vadd.f32 %v38, %v94
  %96 = vmatmul.f32.gmra.mxu0 %v53
  %v97 = vpop.f32.mrf.mxu0
  %v98 = vadd.f32 %v38, %v97
  %99 = vmatmul.f32.gmra.mxu0 %v56
  %v100 = vpop.f32.mrf.mxu0
  %v101 = vadd.f32 %v38, %v100
  %102 = vmatmul.f32.gmra.mxu0 %v59
  %v103 = vpop.f32.mrf.mxu0
  %v104 = vadd.f32 %v38, %v103
  %105 = vmatmul.f32.gmra.mxu0 %v62
  %v106 = vpop.f32.mrf.mxu0
  %v107 = vadd.f32 %v38, %v106
  %108 = vdwg.mxu0
  %110 = vrot.lane.b32.xlu0 %v16, 96
  %v111 = vpop.permute.xlu0 %110
  %vm112 = vcmask 130048
  %v113 = vsel %vm112, %v111, 0
  %115 = vmatpush.msra.mxu0 0.0
  %116 = vmatpush.msra.mxu0 0.0
  %117 = vmatpush.msra.mxu0 0.0
  %118 = vmatpush.msra.mxu0 0.0
  %119 = vmatpush.msra.mxu0 0.0
  %120 = vmatpush.msra.mxu0 0.0
  %121 = vmatpush.msra.mxu0 0.0
  %122 = vmatpush.msra.mxu0 0.0
  %123 = vmatpush.msra.mxu0 0.0
  %124 = vmatpush.msra.mxu0 0.0
  %125 = vmatpush.msra.mxu0 0.0
  %126 = vmatpush.msra.mxu0 0.0
  %127 = vmatpush.msra.mxu0 0.0
  %128 = vmatpush.msra.mxu0 0.0
  %129 = vmatpush.msra.mxu0 %v24
  %130 = vmatpush.msra.mxu0 %v23
  %131 = vmatmul.f32.gmra.mxu0 %v113
  %v132 = vpop.f32.mrf.mxu0
  %v133 = vadd.f32 %v26, %v132
  %134 = vdwg.mxu0
  %v135 = vsel %vm112, %v16, 0
  %137 = vmatpush.msra.mxu0 0.0
  %138 = vmatpush.msra.mxu0 0.0
  %139 = vmatpush.msra.mxu0 0.0
  %140 = vmatpush.msra.mxu0 0.0
  %141 = vmatpush.msra.mxu0 0.0
  %142 = vmatpush.msra.mxu0 0.0
  %143 = vmatpush.msra.mxu0 0.0
  %144 = vmatpush.msra.mxu0 0.0
  %145 = vmatpush.msra.mxu0 0.0
  %146 = vmatpush.msra.mxu0 0.0
  %147 = vmatpush.msra.mxu0 0.0
  %148 = vmatpush.msra.mxu0 0.0
  %149 = vmatpush.msra.mxu0 0.0
  %150 = vmatpush.msra.mxu0 0.0
  %151 = vmatpush.msra.mxu0 %v20
  %152 = vmatpush.msra.mxu0 %v19
  %153 = vmatmul.f32.gmra.mxu0 %v135
  %v154 = vpop.f32.mrf.mxu0
  %v155 = vadd.f32 0.0, %v154
  %156 = vdwg.mxu0
  %v157 = vadd.f32 %v86, %v155
  %v158 = vmul.f32 %v157, 0.5
  %v159 = vtanh.pop %v158
  %v160 = vmul.f32 %v159, 0.5
  %v161 = vadd.f32 %v160, 0.5
  %v162 = vtanh.pop %v157
  %v163 = vmul.f32 %v161, %v16
  %165 = vrot.lane.b32.xlu0 %v162, 96
  %v166 = vpop.permute.xlu0 %165
  %v168 = vmul.f32 %v161, %v166
  %170 = vrot.lane.b32.xlu0 %v168, 16
  %v171 = vpop.permute.xlu0 %170
  %v173 = vadd.f32 %v163, %v171
  %v174 = vtanh.pop %v173
  %176 = vrot.lane.b32.xlu0 %v174, 32
  %v177 = vpop.permute.xlu0 %176
  %v179 = vmul.f32 %v161, %v177
  %181 = vrot.lane.b32.xlu0 %v179, 80
  %v182 = vpop.permute.xlu0 %181
  %v183 = vsel %vm112, %v182, 0
  %185 = vmatpush.msra.mxu0 0.0
  %186 = vmatpush.msra.mxu0 0.0
  %187 = vmatpush.msra.mxu0 0.0
  %188 = vmatpush.msra.mxu0 0.0
  %189 = vmatpush.msra.mxu0 0.0
  %190 = vmatpush.msra.mxu0 0.0
  %191 = vmatpush.msra.mxu0 0.0
  %192 = vmatpush.msra.mxu0 0.0
  %193 = vmatpush.msra.mxu0 0.0
  %194 = vmatpush.msra.mxu0 0.0
  %195 = vmatpush.msra.mxu0 0.0
  %196 = vmatpush.msra.mxu0 0.0
  %197 = vmatpush.msra.mxu0 0.0
  %198 = vmatpush.msra.mxu0 0.0
  %199 = vmatpush.msra.mxu0 %v22
  %200 = vmatpush.msra.mxu0 %v21
  %201 = vmatmul.f32.gmra.mxu0 %v183
  %v202 = vpop.f32.mrf.mxu0
  %v203 = vadd.f32 %v133, %v202
  %204 = vdwg.mxu0
  %v205 = vmul.f32 %v203, 0.5
  %v206 = vtanh.pop %v205
  %v207 = vmul.f32 %v206, 0.5
  %v208 = vadd.f32 %v207, 0.5
  %v209 = vtanh.pop %v203
  %v211 = vmul.f32 %v208, %v111
  %213 = vrot.lane.b32.xlu0 %v209, 96
  %v214 = vpop.permute.xlu0 %213
  %v216 = vmul.f32 %v208, %v214
  %218 = vrot.lane.b32.xlu0 %v216, 16
  %v219 = vpop.permute.xlu0 %218
  %v221 = vadd.f32 %v211, %v219
  %v222 = vtanh.pop %v221
  %224 = vrot.lane.b32.xlu0 %v222, 32
  %v225 = vpop.permute.xlu0 %224
  %v227 = vmul.f32 %v208, %v225
  %229 = vrot.lane.b32.xlu0 %v227, 80
  %v230 = vpop.permute.xlu0 %229
  %232 = vst.msk [vmem:[#allocation2] sm:$0xff] %vm112, %v230
  %v233 = vsel %vm112, %v230, 0
  %235 = vmatpush.msra.mxu0 0.0
  %236 = vmatpush.msra.mxu0 0.0
  %237 = vmatpush.msra.mxu0 0.0
  %238 = vmatpush.msra.mxu0 0.0
  %239 = vmatpush.msra.mxu0 0.0
  %240 = vmatpush.msra.mxu0 0.0
  %241 = vmatpush.msra.mxu0 0.0
  %242 = vmatpush.msra.mxu0 0.0
  %243 = vmatpush.msra.mxu0 0.0
  %244 = vmatpush.msra.mxu0 0.0
  %245 = vmatpush.msra.mxu0 0.0
  %246 = vmatpush.msra.mxu0 0.0
  %247 = vmatpush.msra.mxu0 0.0
  %248 = vmatpush.msra.mxu0 0.0
  %249 = vmatpush.msra.mxu0 %v24
  %250 = vmatpush.msra.mxu0 %v23
  %251 = vmatmul.f32.gmra.mxu0 %v233
  %v252 = vpop.f32.mrf.mxu0
  %v253 = vadd.f32 %v26, %v252
  %254 = vdwg.mxu0
  %255 = vmatpush.msra.mxu0 0.0
  %256 = vmatpush.msra.mxu0 0.0
  %257 = vmatpush.msra.mxu0 0.0
  %258 = vmatpush.msra.mxu0 0.0
  %259 = vmatpush.msra.mxu0 0.0
  %260 = vmatpush.msra.mxu0 0.0
  %261 = vmatpush.msra.mxu0 0.0
  %262 = vmatpush.msra.mxu0 0.0
  %263 = vmatpush.msra.mxu0 0.0
  %264 = vmatpush.msra.mxu0 0.0
  %265 = vmatpush.msra.mxu0 0.0
  %266 = vmatpush.msra.mxu0 0.0
  %267 = vmatpush.msra.mxu0 0.0
  %268 = vmatpush.msra.mxu0 0.0
  %269 = vmatpush.msra.mxu0 %v20
  %270 = vmatpush.msra.mxu0 %v19
  %271 = vmatmul.f32.gmra.mxu0 %v183
  %v272 = vpop.f32.mrf.mxu0
  %v273 = vadd.f32 0.0, %v272
  %274 = vdwg.mxu0
  %v275 = vadd.f32 %v89, %v273
  %v276 = vmul.f32 %v275, 0.5
  %v277 = vtanh.pop %v276
  %v278 = vmul.f32 %v277, 0.5
  %v279 = vadd.f32 %v278, 0.5
  %v280 = vtanh.pop %v275
  %v281 = vmul.f32 %v279, %v173
  %283 = vrot.lane.b32.xlu0 %v280, 96
  %v284 = vpop.permute.xlu0 %283
  %v286 = vmul.f32 %v279, %v284
  %288 = vrot.lane.b32.xlu0 %v286, 16
  %v289 = vpop.permute.xlu0 %288
  %v291 = vadd.f32 %v281, %v289
  %v292 = vtanh.pop %v291
  %294 = vrot.lane.b32.xlu0 %v292, 32
  %v295 = vpop.permute.xlu0 %294
  %v297 = vmul.f32 %v279, %v295
  %299 = vrot.lane.b32.xlu0 %v297, 80
  %v300 = vpop.permute.xlu0 %299
  %v301 = vsel %vm112, %v300, 0
  %303 = vmatpush.msra.mxu0 0.0
  %304 = vmatpush.msra.mxu0 0.0
  %305 = vmatpush.msra.mxu0 0.0
  %306 = vmatpush.msra.mxu0 0.0
  %307 = vmatpush.msra.mxu0 0.0
  %308 = vmatpush.msra.mxu0 0.0
  %309 = vmatpush.msra.mxu0 0.0
  %310 = vmatpush.msra.mxu0 0.0
  %311 = vmatpush.msra.mxu0 0.0
  %312 = vmatpush.msra.mxu0 0.0
  %313 = vmatpush.msra.mxu0 0.0
  %314 = vmatpush.msra.mxu0 0.0
  %315 = vmatpush.msra.mxu0 0.0
  %316 = vmatpush.msra.mxu0 0.0
  %317 = vmatpush.msra.mxu0 %v22
  %318 = vmatpush.msra.mxu0 %v21
  %319 = vmatmul.f32.gmra.mxu0 %v301
  %v320 = vpop.f32.mrf.mxu0
  %v321 = vadd.f32 %v253, %v320
  %322 = vdwg.mxu0
  %v323 = vmul.f32 %v321, 0.5
  %v324 = vtanh.pop %v323
  %v325 = vmul.f32 %v324, 0.5
  %v326 = vadd.f32 %v325, 0.5
  %v327 = vtanh.pop %v321
  %v328 = vmul.f32 %v326, %v221
  %330 = vrot.lane.b32.xlu0 %v327, 96
  %v331 = vpop.permute.xlu0 %330
  %v333 = vmul.f32 %v326, %v331
  %335 = vrot.lane.b32.xlu0 %v333, 16
  %v336 = vpop.permute.xlu0 %335
  %v338 = vadd.f32 %v328, %v336
  %v339 = vtanh.pop %v338
  %341 = vrot.lane.b32.xlu0 %v339, 32
  %v342 = vpop.permute.xlu0 %341
  %v344 = vmul.f32 %v326, %v342
  %346 = vrot.lane.b32.xlu0 %v344, 80
  %v347 = vpop.permute.xlu0 %346
  %349 = vst.msk [vmem:[#allocation2 + $0x8] sm:$0xff] %vm112, %v347
  %v350 = vsel %vm112, %v347, 0
  %352 = vmatpush.msra.mxu0 0.0
  %353 = vmatpush.msra.mxu0 0.0
  %354 = vmatpush.msra.mxu0 0.0
  %355 = vmatpush.msra.mxu0 0.0
  %356 = vmatpush.msra.mxu0 0.0
  %357 = vmatpush.msra.mxu0 0.0
  %358 = vmatpush.msra.mxu0 0.0
  %359 = vmatpush.msra.mxu0 0.0
  %360 = vmatpush.msra.mxu0 0.0
  %361 = vmatpush.msra.mxu0 0.0
  %362 = vmatpush.msra.mxu0 0.0
  %363 = vmatpush.msra.mxu0 0.0
  %364 = vmatpush.msra.mxu0 0.0
  %365 = vmatpush.msra.mxu0 0.0
  %366 = vmatpush.msra.mxu0 %v24
  %367 = vmatpush.msra.mxu0 %v23
  %368 = vmatmul.f32.gmra.mxu0 %v350
  %v369 = vpop.f32.mrf.mxu0
  %v370 = vadd.f32 %v26, %v369
  %371 = vdwg.mxu0
  %372 = vmatpush.msra.mxu0 0.0
  %373 = vmatpush.msra.mxu0 0.0
  %374 = vmatpush.msra.mxu0 0.0
  %375 = vmatpush.msra.mxu0 0.0
  %376 = vmatpush.msra.mxu0 0.0
  %377 = vmatpush.msra.mxu0 0.0
  %378 = vmatpush.msra.mxu0 0.0
  %379 = vmatpush.msra.mxu0 0.0
  %380 = vmatpush.msra.mxu0 0.0
  %381 = vmatpush.msra.mxu0 0.0
  %382 = vmatpush.msra.mxu0 0.0
  %383 = vmatpush.msra.mxu0 0.0
  %384 = vmatpush.msra.mxu0 0.0
  %385 = vmatpush.msra.mxu0 0.0
  %386 = vmatpush.msra.mxu0 %v20
  %387 = vmatpush.msra.mxu0 %v19
  %388 = vmatmul.f32.gmra.mxu0 %v301
  %v389 = vpop.f32.mrf.mxu0
  %v390 = vadd.f32 0.0, %v389
  %391 = vdwg.mxu0
  %v392 = vadd.f32 %v92, %v390
  %v393 = vmul.f32 %v392, 0.5
  %v394 = vtanh.pop %v393
  %v395 = vmul.f32 %v394, 0.5
  %v396 = vadd.f32 %v395, 0.5
  %v397 = vtanh.pop %v392
  %v398 = vmul.f32 %v396, %v291
  %400 = vrot.lane.b32.xlu0 %v397, 96
  %v401 = vpop.permute.xlu0 %400
  %v403 = vmul.f32 %v396, %v401
  %405 = vrot.lane.b32.xlu0 %v403, 16
  %v406 = vpop.permute.xlu0 %405
  %v408 = vadd.f32 %v398, %v406
  %v409 = vtanh.pop %v408
  %411 = vrot.lane.b32.xlu0 %v409, 32
  %v412 = vpop.permute.xlu0 %411
  %v414 = vmul.f32 %v396, %v412
  %416 = vrot.lane.b32.xlu0 %v414, 80
  %v417 = vpop.permute.xlu0 %416
  %v418 = vsel %vm112, %v417, 0
  %420 = vmatpush.msra.mxu0 0.0
  %421 = vmatpush.msra.mxu0 0.0
  %422 = vmatpush.msra.mxu0 0.0
  %423 = vmatpush.msra.mxu0 0.0
  %424 = vmatpush.msra.mxu0 0.0
  %425 = vmatpush.msra.mxu0 0.0
  %426 = vmatpush.msra.mxu0 0.0
  %427 = vmatpush.msra.mxu0 0.0
  %428 = vmatpush.msra.mxu0 0.0
  %429 = vmatpush.msra.mxu0 0.0
  %430 = vmatpush.msra.mxu0 0.0
  %431 = vmatpush.msra.mxu0 0.0
  %432 = vmatpush.msra.mxu0 0.0
  %433 = vmatpush.msra.mxu0 0.0
  %434 = vmatpush.msra.mxu0 %v22
  %435 = vmatpush.msra.mxu0 %v21
  %436 = vmatmul.f32.gmra.mxu0 %v418
  %v437 = vpop.f32.mrf.mxu0
  %v438 = vadd.f32 %v370, %v437
  %439 = vdwg.mxu0
  %v440 = vmul.f32 %v438, 0.5
  %v441 = vtanh.pop %v440
  %v442 = vmul.f32 %v441, 0.5
  %v443 = vadd.f32 %v442, 0.5
  %v444 = vtanh.pop %v438
  %v445 = vmul.f32 %v443, %v338
  %447 = vrot.lane.b32.xlu0 %v444, 96
  %v448 = vpop.permute.xlu0 %447
  %v450 = vmul.f32 %v443, %v448
  %452 = vrot.lane.b32.xlu0 %v450, 16
  %v453 = vpop.permute.xlu0 %452
  %v455 = vadd.f32 %v445, %v453
  %v456 = vtanh.pop %v455
  %458 = vrot.lane.b32.xlu0 %v456, 32
  %v459 = vpop.permute.xlu0 %458
  %v461 = vmul.f32 %v443, %v459
  %463 = vrot.lane.b32.xlu0 %v461, 80
  %v464 = vpop.permute.xlu0 %463
  %466 = vst.msk [vmem:[#allocation2 + $0x10] sm:$0xff] %vm112, %v464
  %v467 = vsel %vm112, %v464, 0
  %469 = vmatpush.msra.mxu0 0.0
  %470 = vmatpush.msra.mxu0 0.0
  %471 = vmatpush.msra.mxu0 0.0
  %472 = vmatpush.msra.mxu0 0.0
  %473 = vmatpush.msra.mxu0 0.0
  %474 = vmatpush.msra.mxu0 0.0
  %475 = vmatpush.msra.mxu0 0.0
  %476 = vmatpush.msra.mxu0 0.0
  %477 = vmatpush.msra.mxu0 0.0
  %478 = vmatpush.msra.mxu0 0.0
  %479 = vmatpush.msra.mxu0 0.0
  %480 = vmatpush.msra.mxu0 0.0
  %481 = vmatpush.msra.mxu0 0.0
  %482 = vmatpush.msra.mxu0 0.0
  %483 = vmatpush.msra.mxu0 %v24
  %484 = vmatpush.msra.mxu0 %v23
  %485 = vmatmul.f32.gmra.mxu0 %v467
  %v486 = vpop.f32.mrf.mxu0
  %v487 = vadd.f32 %v26, %v486
  %488 = vdwg.mxu0
  %489 = vmatpush.msra.mxu0 0.0
  %490 = vmatpush.msra.mxu0 0.0
  %491 = vmatpush.msra.mxu0 0.0
  %492 = vmatpush.msra.mxu0 0.0
  %493 = vmatpush.msra.mxu0 0.0
  %494 = vmatpush.msra.mxu0 0.0
  %495 = vmatpush.msra.mxu0 0.0
  %496 = vmatpush.msra.mxu0 0.0
  %497 = vmatpush.msra.mxu0 0.0
  %498 = vmatpush.msra.mxu0 0.0
  %499 = vmatpush.msra.mxu0 0.0
  %500 = vmatpush.msra.mxu0 0.0
  %501 = vmatpush.msra.mxu0 0.0
  %502 = vmatpush.msra.mxu0 0.0
  %503 = vmatpush.msra.mxu0 %v20
  %504 = vmatpush.msra.mxu0 %v19
  %505 = vmatmul.f32.gmra.mxu0 %v418
  %v506 = vpop.f32.mrf.mxu0
  %v507 = vadd.f32 0.0, %v506
  %508 = vdwg.mxu0
  %v509 = vadd.f32 %v95, %v507
  %v510 = vmul.f32 %v509, 0.5
  %v511 = vtanh.pop %v510
  %v512 = vmul.f32 %v511, 0.5
  %v513 = vadd.f32 %v512, 0.5
  %v514 = vtanh.pop %v509
  %v515 = vmul.f32 %v513, %v408
  %517 = vrot.lane.b32.xlu0 %v514, 96
  %v518 = vpop.permute.xlu0 %517
  %v520 = vmul.f32 %v513, %v518
  %522 = vrot.lane.b32.xlu0 %v520, 16
  %v523 = vpop.permute.xlu0 %522
  %v525 = vadd.f32 %v515, %v523
  %v526 = vtanh.pop %v525
  %528 = vrot.lane.b32.xlu0 %v526, 32
  %v529 = vpop.permute.xlu0 %528
  %v531 = vmul.f32 %v513, %v529
  %533 = vrot.lane.b32.xlu0 %v531, 80
  %v534 = vpop.permute.xlu0 %533
  %v535 = vsel %vm112, %v534, 0
  %537 = vmatpush.msra.mxu0 0.0
  %538 = vmatpush.msra.mxu0 0.0
  %539 = vmatpush.msra.mxu0 0.0
  %540 = vmatpush.msra.mxu0 0.0
  %541 = vmatpush.msra.mxu0 0.0
  %542 = vmatpush.msra.mxu0 0.0
  %543 = vmatpush.msra.mxu0 0.0
  %544 = vmatpush.msra.mxu0 0.0
  %545 = vmatpush.msra.mxu0 0.0
  %546 = vmatpush.msra.mxu0 0.0
  %547 = vmatpush.msra.mxu0 0.0
  %548 = vmatpush.msra.mxu0 0.0
  %549 = vmatpush.msra.mxu0 0.0
  %550 = vmatpush.msra.mxu0 0.0
  %551 = vmatpush.msra.mxu0 %v22
  %552 = vmatpush.msra.mxu0 %v21
  %553 = vmatmul.f32.gmra.mxu0 %v535
  %v554 = vpop.f32.mrf.mxu0
  %v555 = vadd.f32 %v487, %v554
  %556 = vdwg.mxu0
  %v557 = vmul.f32 %v555, 0.5
  %v558 = vtanh.pop %v557
  %v559 = vmul.f32 %v558, 0.5
  %v560 = vadd.f32 %v559, 0.5
  %v561 = vtanh.pop %v555
  %v562 = vmul.f32 %v560, %v455
  %564 = vrot.lane.b32.xlu0 %v561, 96
  %v565 = vpop.permute.xlu0 %564
  %v567 = vmul.f32 %v560, %v565
  %569 = vrot.lane.b32.xlu0 %v567, 16
  %v570 = vpop.permute.xlu0 %569
  %v572 = vadd.f32 %v562, %v570
  %v573 = vtanh.pop %v572
  %575 = vrot.lane.b32.xlu0 %v573, 32
  %v576 = vpop.permute.xlu0 %575
  %v578 = vmul.f32 %v560, %v576
  %580 = vrot.lane.b32.xlu0 %v578, 80
  %v581 = vpop.permute.xlu0 %580
  %583 = vst.msk [vmem:[#allocation2 + $0x18] sm:$0xff] %vm112, %v581
  %v584 = vsel %vm112, %v581, 0
  %586 = vmatpush.msra.mxu0 0.0
  %587 = vmatpush.msra.mxu0 0.0
  %588 = vmatpush.msra.mxu0 0.0
  %589 = vmatpush.msra.mxu0 0.0
  %590 = vmatpush.msra.mxu0 0.0
  %591 = vmatpush.msra.mxu0 0.0
  %592 = vmatpush.msra.mxu0 0.0
  %593 = vmatpush.msra.mxu0 0.0
  %594 = vmatpush.msra.mxu0 0.0
  %595 = vmatpush.msra.mxu0 0.0
  %596 = vmatpush.msra.mxu0 0.0
  %597 = vmatpush.msra.mxu0 0.0
  %598 = vmatpush.msra.mxu0 0.0
  %599 = vmatpush.msra.mxu0 0.0
  %600 = vmatpush.msra.mxu0 %v24
  %601 = vmatpush.msra.mxu0 %v23
  %602 = vmatmul.f32.gmra.mxu0 %v584
  %v603 = vpop.f32.mrf.mxu0
  %v604 = vadd.f32 %v26, %v603
  %605 = vdwg.mxu0
  %606 = vmatpush.msra.mxu0 0.0
  %607 = vmatpush.msra.mxu0 0.0
  %608 = vmatpush.msra.mxu0 0.0
  %609 = vmatpush.msra.mxu0 0.0
  %610 = vmatpush.msra.mxu0 0.0
  %611 = vmatpush.msra.mxu0 0.0
  %612 = vmatpush.msra.mxu0 0.0
  %613 = vmatpush.msra.mxu0 0.0
  %614 = vmatpush.msra.mxu0 0.0
  %615 = vmatpush.msra.mxu0 0.0
  %616 = vmatpush.msra.mxu0 0.0
  %617 = vmatpush.msra.mxu0 0.0
  %618 = vmatpush.msra.mxu0 0.0
  %619 = vmatpush.msra.mxu0 0.0
  %620 = vmatpush.msra.mxu0 %v20
  %621 = vmatpush.msra.mxu0 %v19
  %622 = vmatmul.f32.gmra.mxu0 %v535
  %v623 = vpop.f32.mrf.mxu0
  %v624 = vadd.f32 0.0, %v623
  %625 = vdwg.mxu0
  %v626 = vadd.f32 %v98, %v624
  %v627 = vmul.f32 %v626, 0.5
  %v628 = vtanh.pop %v627
  %v629 = vmul.f32 %v628, 0.5
  %v630 = vadd.f32 %v629, 0.5
  %v631 = vtanh.pop %v626
  %v632 = vmul.f32 %v630, %v525
  %634 = vrot.lane.b32.xlu0 %v631, 96
  %v635 = vpop.permute.xlu0 %634
  %v637 = vmul.f32 %v630, %v635
  %639 = vrot.lane.b32.xlu0 %v637, 16
  %v640 = vpop.permute.xlu0 %639
  %v642 = vadd.f32 %v632, %v640
  %v643 = vtanh.pop %v642
  %645 = vrot.lane.b32.xlu0 %v643, 32
  %v646 = vpop.permute.xlu0 %645
  %v648 = vmul.f32 %v630, %v646
  %650 = vrot.lane.b32.xlu0 %v648, 80
  %v651 = vpop.permute.xlu0 %650
  %v652 = vsel %vm112, %v651, 0
  %654 = vmatpush.msra.mxu0 0.0
  %655 = vmatpush.msra.mxu0 0.0
  %656 = vmatpush.msra.mxu0 0.0
  %657 = vmatpush.msra.mxu0 0.0
  %658 = vmatpush.msra.mxu0 0.0
  %659 = vmatpush.msra.mxu0 0.0
  %660 = vmatpush.msra.mxu0 0.0
  %661 = vmatpush.msra.mxu0 0.0
  %662 = vmatpush.msra.mxu0 0.0
  %663 = vmatpush.msra.mxu0 0.0
  %664 = vmatpush.msra.mxu0 0.0
  %665 = vmatpush.msra.mxu0 0.0
  %666 = vmatpush.msra.mxu0 0.0
  %667 = vmatpush.msra.mxu0 0.0
  %668 = vmatpush.msra.mxu0 %v22
  %669 = vmatpush.msra.mxu0 %v21
  %670 = vmatmul.f32.gmra.mxu0 %v652
  %v671 = vpop.f32.mrf.mxu0
  %v672 = vadd.f32 %v604, %v671
  %673 = vdwg.mxu0
  %v674 = vmul.f32 %v672, 0.5
  %v675 = vtanh.pop %v674
  %v676 = vmul.f32 %v675, 0.5
  %v677 = vadd.f32 %v676, 0.5
  %v678 = vtanh.pop %v672
  %v679 = vmul.f32 %v677, %v572
  %681 = vrot.lane.b32.xlu0 %v678, 96
  %v682 = vpop.permute.xlu0 %681
  %v684 = vmul.f32 %v677, %v682
  %686 = vrot.lane.b32.xlu0 %v684, 16
  %v687 = vpop.permute.xlu0 %686
  %v689 = vadd.f32 %v679, %v687
  %v690 = vtanh.pop %v689
  %692 = vrot.lane.b32.xlu0 %v690, 32
  %v693 = vpop.permute.xlu0 %692
  %v695 = vmul.f32 %v677, %v693
  %697 = vrot.lane.b32.xlu0 %v695, 80
  %v698 = vpop.permute.xlu0 %697
  %700 = vst.msk [vmem:[#allocation2 + $0x20] sm:$0xff] %vm112, %v698
  %v701 = vsel %vm112, %v698, 0
  %703 = vmatpush.msra.mxu0 0.0
  %704 = vmatpush.msra.mxu0 0.0
  %705 = vmatpush.msra.mxu0 0.0
  %706 = vmatpush.msra.mxu0 0.0
  %707 = vmatpush.msra.mxu0 0.0
  %708 = vmatpush.msra.mxu0 0.0
  %709 = vmatpush.msra.mxu0 0.0
  %710 = vmatpush.msra.mxu0 0.0
  %711 = vmatpush.msra.mxu0 0.0
  %712 = vmatpush.msra.mxu0 0.0
  %713 = vmatpush.msra.mxu0 0.0
  %714 = vmatpush.msra.mxu0 0.0
  %715 = vmatpush.msra.mxu0 0.0
  %716 = vmatpush.msra.mxu0 0.0
  %717 = vmatpush.msra.mxu0 %v24
  %718 = vmatpush.msra.mxu0 %v23
  %719 = vmatmul.f32.gmra.mxu0 %v701
  %v720 = vpop.f32.mrf.mxu0
  %v721 = vadd.f32 %v26, %v720
  %722 = vdwg.mxu0
  %723 = vmatpush.msra.mxu0 0.0
  %724 = vmatpush.msra.mxu0 0.0
  %725 = vmatpush.msra.mxu0 0.0
  %726 = vmatpush.msra.mxu0 0.0
  %727 = vmatpush.msra.mxu0 0.0
  %728 = vmatpush.msra.mxu0 0.0
  %729 = vmatpush.msra.mxu0 0.0
  %730 = vmatpush.msra.mxu0 0.0
  %731 = vmatpush.msra.mxu0 0.0
  %732 = vmatpush.msra.mxu0 0.0
  %733 = vmatpush.msra.mxu0 0.0
  %734 = vmatpush.msra.mxu0 0.0
  %735 = vmatpush.msra.mxu0 0.0
  %736 = vmatpush.msra.mxu0 0.0
  %737 = vmatpush.msra.mxu0 %v20
  %738 = vmatpush.msra.mxu0 %v19
  %739 = vmatmul.f32.gmra.mxu0 %v652
  %v740 = vpop.f32.mrf.mxu0
  %v741 = vadd.f32 0.0, %v740
  %742 = vdwg.mxu0
  %v743 = vadd.f32 %v101, %v741
  %v744 = vmul.f32 %v743, 0.5
  %v745 = vtanh.pop %v744
  %v746 = vmul.f32 %v745, 0.5
  %v747 = vadd.f32 %v746, 0.5
  %v748 = vtanh.pop %v743
  %v749 = vmul.f32 %v747, %v642
  %751 = vrot.lane.b32.xlu0 %v748, 96
  %v752 = vpop.permute.xlu0 %751
  %v754 = vmul.f32 %v747, %v752
  %756 = vrot.lane.b32.xlu0 %v754, 16
  %v757 = vpop.permute.xlu0 %756
  %v759 = vadd.f32 %v749, %v757
  %v760 = vtanh.pop %v759
  %762 = vrot.lane.b32.xlu0 %v760, 32
  %v763 = vpop.permute.xlu0 %762
  %v765 = vmul.f32 %v747, %v763
  %767 = vrot.lane.b32.xlu0 %v765, 80
  %v768 = vpop.permute.xlu0 %767
  %v769 = vsel %vm112, %v768, 0
  %771 = vmatpush.msra.mxu0 0.0
  %772 = vmatpush.msra.mxu0 0.0
  %773 = vmatpush.msra.mxu0 0.0
  %774 = vmatpush.msra.mxu0 0.0
  %775 = vmatpush.msra.mxu0 0.0
  %776 = vmatpush.msra.mxu0 0.0
  %777 = vmatpush.msra.mxu0 0.0
  %778 = vmatpush.msra.mxu0 0.0
  %779 = vmatpush.msra.mxu0 0.0
  %780 = vmatpush.msra.mxu0 0.0
  %781 = vmatpush.msra.mxu0 0.0
  %782 = vmatpush.msra.mxu0 0.0
  %783 = vmatpush.msra.mxu0 0.0
  %784 = vmatpush.msra.mxu0 0.0
  %785 = vmatpush.msra.mxu0 %v22
  %786 = vmatpush.msra.mxu0 %v21
  %787 = vmatmul.f32.gmra.mxu0 %v769
  %v788 = vpop.f32.mrf.mxu0
  %v789 = vadd.f32 %v721, %v788
  %790 = vdwg.mxu0
  %v791 = vmul.f32 %v789, 0.5
  %v792 = vtanh.pop %v791
  %v793 = vmul.f32 %v792, 0.5
  %v794 = vadd.f32 %v793, 0.5
  %v795 = vtanh.pop %v789
  %v796 = vmul.f32 %v794, %v689
  %798 = vrot.lane.b32.xlu0 %v795, 96
  %v799 = vpop.permute.xlu0 %798
  %v801 = vmul.f32 %v794, %v799
  %803 = vrot.lane.b32.xlu0 %v801, 16
  %v804 = vpop.permute.xlu0 %803
  %v806 = vadd.f32 %v796, %v804
  %v807 = vtanh.pop %v806
  %809 = vrot.lane.b32.xlu0 %v807, 32
  %v810 = vpop.permute.xlu0 %809
  %v812 = vmul.f32 %v794, %v810
  %814 = vrot.lane.b32.xlu0 %v812, 80
  %v815 = vpop.permute.xlu0 %814
  %817 = vst.msk [vmem:[#allocation2 + $0x28] sm:$0xff] %vm112, %v815
  %v818 = vsel %vm112, %v815, 0
  %820 = vmatpush.msra.mxu0 0.0
  %821 = vmatpush.msra.mxu0 0.0
  %822 = vmatpush.msra.mxu0 0.0
  %823 = vmatpush.msra.mxu0 0.0
  %824 = vmatpush.msra.mxu0 0.0
  %825 = vmatpush.msra.mxu0 0.0
  %826 = vmatpush.msra.mxu0 0.0
  %827 = vmatpush.msra.mxu0 0.0
  %828 = vmatpush.msra.mxu0 0.0
  %829 = vmatpush.msra.mxu0 0.0
  %830 = vmatpush.msra.mxu0 0.0
  %831 = vmatpush.msra.mxu0 0.0
  %832 = vmatpush.msra.mxu0 0.0
  %833 = vmatpush.msra.mxu0 0.0
  %834 = vmatpush.msra.mxu0 %v24
  %835 = vmatpush.msra.mxu0 %v23
  %836 = vmatmul.f32.gmra.mxu0 %v818
  %v837 = vpop.f32.mrf.mxu0
  %v838 = vadd.f32 %v26, %v837
  %839 = vdwg.mxu0
  %840 = vmatpush.msra.mxu0 0.0
  %841 = vmatpush.msra.mxu0 0.0
  %842 = vmatpush.msra.mxu0 0.0
  %843 = vmatpush.msra.mxu0 0.0
  %844 = vmatpush.msra.mxu0 0.0
  %845 = vmatpush.msra.mxu0 0.0
  %846 = vmatpush.msra.mxu0 0.0
  %847 = vmatpush.msra.mxu0 0.0
  %848 = vmatpush.msra.mxu0 0.0
  %849 = vmatpush.msra.mxu0 0.0
  %850 = vmatpush.msra.mxu0 0.0
  %851 = vmatpush.msra.mxu0 0.0
  %852 = vmatpush.msra.mxu0 0.0
  %853 = vmatpush.msra.mxu0 0.0
  %854 = vmatpush.msra.mxu0 %v20
  %855 = vmatpush.msra.mxu0 %v19
  %856 = vmatmul.f32.gmra.mxu0 %v769
  %v857 = vpop.f32.mrf.mxu0
  %v858 = vadd.f32 0.0, %v857
  %859 = vdwg.mxu0
  %v860 = vadd.f32 %v104, %v858
  %v861 = vmul.f32 %v860, 0.5
  %v862 = vtanh.pop %v861
  %v863 = vmul.f32 %v862, 0.5
  %v864 = vadd.f32 %v863, 0.5
  %v865 = vtanh.pop %v860
  %v866 = vmul.f32 %v864, %v759
  %868 = vrot.lane.b32.xlu0 %v865, 96
  %v869 = vpop.permute.xlu0 %868
  %v871 = vmul.f32 %v864, %v869
  %873 = vrot.lane.b32.xlu0 %v871, 16
  %v874 = vpop.permute.xlu0 %873
  %v876 = vadd.f32 %v866, %v874
  %v877 = vtanh.pop %v876
  %879 = vrot.lane.b32.xlu0 %v877, 32
  %v880 = vpop.permute.xlu0 %879
  %v882 = vmul.f32 %v864, %v880
  %884 = vrot.lane.b32.xlu0 %v882, 80
  %v885 = vpop.permute.xlu0 %884
  %v886 = vsel %vm112, %v885, 0
  %888 = vmatpush.msra.mxu0 0.0
  %889 = vmatpush.msra.mxu0 0.0
  %890 = vmatpush.msra.mxu0 0.0
  %891 = vmatpush.msra.mxu0 0.0
  %892 = vmatpush.msra.mxu0 0.0
  %893 = vmatpush.msra.mxu0 0.0
  %894 = vmatpush.msra.mxu0 0.0
  %895 = vmatpush.msra.mxu0 0.0
  %896 = vmatpush.msra.mxu0 0.0
  %897 = vmatpush.msra.mxu0 0.0
  %898 = vmatpush.msra.mxu0 0.0
  %899 = vmatpush.msra.mxu0 0.0
  %900 = vmatpush.msra.mxu0 0.0
  %901 = vmatpush.msra.mxu0 0.0
  %902 = vmatpush.msra.mxu0 %v22
  %903 = vmatpush.msra.mxu0 %v21
  %904 = vmatmul.f32.gmra.mxu0 %v886
  %v905 = vpop.f32.mrf.mxu0
  %v906 = vadd.f32 %v838, %v905
  %907 = vdwg.mxu0
  %v908 = vmul.f32 %v906, 0.5
  %v909 = vtanh.pop %v908
  %v910 = vmul.f32 %v909, 0.5
  %v911 = vadd.f32 %v910, 0.5
  %v912 = vtanh.pop %v906
  %v913 = vmul.f32 %v911, %v806
  %915 = vrot.lane.b32.xlu0 %v912, 96
  %v916 = vpop.permute.xlu0 %915
  %v918 = vmul.f32 %v911, %v916
  %920 = vrot.lane.b32.xlu0 %v918, 16
  %v921 = vpop.permute.xlu0 %920
  %v923 = vadd.f32 %v913, %v921
  %v924 = vtanh.pop %v923
  %926 = vrot.lane.b32.xlu0 %v924, 32
  %v927 = vpop.permute.xlu0 %926
  %v929 = vmul.f32 %v911, %v927
  %931 = vrot.lane.b32.xlu0 %v929, 80
  %v932 = vpop.permute.xlu0 %931
  %934 = vst.msk [vmem:[#allocation2 + $0x30] sm:$0xff] %vm112, %v932
  %v935 = vsel %vm112, %v932, 0
  %937 = vmatpush.msra.mxu0 0.0
  %938 = vmatpush.msra.mxu0 0.0
  %939 = vmatpush.msra.mxu0 0.0
  %940 = vmatpush.msra.mxu0 0.0
  %941 = vmatpush.msra.mxu0 0.0
  %942 = vmatpush.msra.mxu0 0.0
  %943 = vmatpush.msra.mxu0 0.0
  %944 = vmatpush.msra.mxu0 0.0
  %945 = vmatpush.msra.mxu0 0.0
  %946 = vmatpush.msra.mxu0 0.0
  %947 = vmatpush.msra.mxu0 0.0
  %948 = vmatpush.msra.mxu0 0.0
  %949 = vmatpush.msra.mxu0 0.0
  %950 = vmatpush.msra.mxu0 0.0
  %951 = vmatpush.msra.mxu0 %v24
  %952 = vmatpush.msra.mxu0 %v23
  %953 = vmatmul.f32.gmra.mxu0 %v935
  %v954 = vpop.f32.mrf.mxu0
  %v955 = vadd.f32 %v26, %v954
  %956 = vdwg.mxu0
  %957 = vmatpush.msra.mxu0 0.0
  %958 = vmatpush.msra.mxu0 0.0
  %959 = vmatpush.msra.mxu0 0.0
  %960 = vmatpush.msra.mxu0 0.0
  %961 = vmatpush.msra.mxu0 0.0
  %962 = vmatpush.msra.mxu0 0.0
  %963 = vmatpush.msra.mxu0 0.0
  %964 = vmatpush.msra.mxu0 0.0
  %965 = vmatpush.msra.mxu0 0.0
  %966 = vmatpush.msra.mxu0 0.0
  %967 = vmatpush.msra.mxu0 0.0
  %968 = vmatpush.msra.mxu0 0.0
  %969 = vmatpush.msra.mxu0 0.0
  %970 = vmatpush.msra.mxu0 0.0
  %971 = vmatpush.msra.mxu0 %v20
  %972 = vmatpush.msra.mxu0 %v19
  %973 = vmatmul.f32.gmra.mxu0 %v886
  %v974 = vpop.f32.mrf.mxu0
  %v975 = vadd.f32 0.0, %v974
  %976 = vdwg.mxu0
  %v977 = vadd.f32 %v107, %v975
  %v978 = vmul.f32 %v977, 0.5
  %v979 = vtanh.pop %v978
  %v980 = vmul.f32 %v979, 0.5
  %v981 = vadd.f32 %v980, 0.5
  %v982 = vtanh.pop %v977
  %v983 = vmul.f32 %v981, %v876
  %985 = vrot.lane.b32.xlu0 %v982, 96
  %v986 = vpop.permute.xlu0 %985
  %v988 = vmul.f32 %v981, %v986
  %990 = vrot.lane.b32.xlu0 %v988, 16
  %v991 = vpop.permute.xlu0 %990
  %v993 = vadd.f32 %v983, %v991
  %v994 = vtanh.pop %v993
  %996 = vrot.lane.b32.xlu0 %v994, 32
  %v997 = vpop.permute.xlu0 %996
  %v999 = vmul.f32 %v981, %v997
  %1001 = vrot.lane.b32.xlu0 %v999, 80
  %v1002 = vpop.permute.xlu0 %1001
  %v1003 = vsel %vm112, %v1002, 0
  %1005 = vmatpush.msra.mxu0 0.0
  %1006 = vmatpush.msra.mxu0 0.0
  %1007 = vmatpush.msra.mxu0 0.0
  %1008 = vmatpush.msra.mxu0 0.0
  %1009 = vmatpush.msra.mxu0 0.0
  %1010 = vmatpush.msra.mxu0 0.0
  %1011 = vmatpush.msra.mxu0 0.0
  %1012 = vmatpush.msra.mxu0 0.0
  %1013 = vmatpush.msra.mxu0 0.0
  %1014 = vmatpush.msra.mxu0 0.0
  %1015 = vmatpush.msra.mxu0 0.0
  %1016 = vmatpush.msra.mxu0 0.0
  %1017 = vmatpush.msra.mxu0 0.0
  %1018 = vmatpush.msra.mxu0 0.0
  %1019 = vmatpush.msra.mxu0 %v22
  %1020 = vmatpush.msra.mxu0 %v21
  %1021 = vmatmul.f32.gmra.mxu0 %v1003
  %v1022 = vpop.f32.mrf.mxu0
  %v1023 = vadd.f32 %v955, %v1022
  %1024 = vdwg.mxu0
  %v1025 = vmul.f32 %v1023, 0.5
  %v1026 = vtanh.pop %v1025
  %v1027 = vmul.f32 %v1026, 0.5
  %v1028 = vadd.f32 %v1027, 0.5
  %v1029 = vtanh.pop %v1023
  %v1030 = vmul.f32 %v1028, %v923
  %1032 = vrot.lane.b32.xlu0 %v1029, 96
  %v1033 = vpop.permute.xlu0 %1032
  %v1035 = vmul.f32 %v1028, %v1033
  %1037 = vrot.lane.b32.xlu0 %v1035, 16
  %v1038 = vpop.permute.xlu0 %1037
  %v1040 = vadd.f32 %v1030, %v1038
  %v1041 = vtanh.pop %v1040
  %1043 = vrot.lane.b32.xlu0 %v1041, 32
  %v1044 = vpop.permute.xlu0 %1043
  %v1046 = vmul.f32 %v1028, %v1044
  %1048 = vrot.lane.b32.xlu0 %v1046, 80
  %v1049 = vpop.permute.xlu0 %1048
  %1051 = vst.msk [vmem:[#allocation2 + $0x38] sm:$0xff] %vm112, %v1049
  %v1052 = vld [vmem:[#allocation2] sm:$0xff]
  %v1053 = vld [vmem:[#allocation2 + $0x8] sm:$0xff]
  %v1054 = vld [vmem:[#allocation2 + $0x10] sm:$0xff]
  %v1055 = vld [vmem:[#allocation2 + $0x18] sm:$0xff]
  %v1056 = vld [vmem:[#allocation2 + $0x20] sm:$0xff]
  %v1057 = vld [vmem:[#allocation2 + $0x28] sm:$0xff]
  %v1058 = vld [vmem:[#allocation2 + $0x30] sm:$0xff]
  %v1059 = vld [vmem:[#allocation2 + $0x38] sm:$0xff]
  %v1060 = vperm.slane %v29, 0
  %v1062 = vsel %vm112, %v1052, 0
  %v1065 = vsel %vm112, %v1053, 0
  %v1068 = vsel %vm112, %v1054, 0
  %v1071 = vsel %vm112, %v1055, 0
  %v1074 = vsel %vm112, %v1056, 0
  %v1077 = vsel %vm112, %v1057, 0
  %v1080 = vsel %vm112, %v1058, 0
  %v1083 = vsel %vm112, %v1059, 0
  %1085 = vmatpush.msra.mxu0 0.0
  %1086 = vmatpush.msra.mxu0 0.0
  %1087 = vmatpush.msra.mxu0 0.0
  %1088 = vmatpush.msra.mxu0 0.0
  %1089 = vmatpush.msra.mxu0 0.0
  %1090 = vmatpush.msra.mxu0 0.0
  %1091 = vmatpush.msra.mxu0 0.0
  %1092 = vmatpush.msra.mxu0 0.0
  %1093 = vmatpush.msra.mxu0 0.0
  %1094 = vmatpush.msra.mxu0 0.0
  %1095 = vmatpush.msra.mxu0 0.0
  %1096 = vmatpush.msra.mxu0 0.0
  %1097 = vmatpush.msra.mxu0 0.0
  %1098 = vmatpush.msra.mxu0 0.0
  %1099 = vmatpush.msra.mxu0 %v28
  %1100 = vmatpush.msra.mxu0 %v27
  %1101 = vmatmul.f32.gmra.mxu0 %v1062
  %v1102 = vpop.f32.mrf.mxu0
  %v1103 = vadd.f32 %v1060, %v1102
  %1104 = vmatmul.f32.gmra.mxu0 %v1065
  %v1105 = vpop.f32.mrf.mxu0
  %v1106 = vadd.f32 %v1060, %v1105
  %1107 = vmatmul.f32.gmra.mxu0 %v1068
  %v1108 = vpop.f32.mrf.mxu0
  %v1109 = vadd.f32 %v1060, %v1108
  %1110 = vmatmul.f32.gmra.mxu0 %v1071
  %v1111 = vpop.f32.mrf.mxu0
  %v1112 = vadd.f32 %v1060, %v1111
  %1113 = vmatmul.f32.gmra.mxu0 %v1074
  %v1114 = vpop.f32.mrf.mxu0
  %v1115 = vadd.f32 %v1060, %v1114
  %1116 = vmatmul.f32.gmra.mxu0 %v1077
  %v1117 = vpop.f32.mrf.mxu0
  %v1118 = vadd.f32 %v1060, %v1117
  %1119 = vmatmul.f32.gmra.mxu0 %v1080
  %v1120 = vpop.f32.mrf.mxu0
  %v1121 = vadd.f32 %v1060, %v1120
  %1122 = vmatmul.f32.gmra.mxu0 %v1083
  %v1123 = vpop.f32.mrf.mxu0
  %v1124 = vadd.f32 %v1060, %v1123
  %1125 = vdwg.mxu0
  %1126 = vst [vmem:[%s3] sm:$0xff] %v1103
  %1127 = vst [vmem:[%s3 + $0x8] sm:$0xff] %v1106
  %1128 = vst [vmem:[%s3 + $0x10] sm:$0xff] %v1109
  %1129 = vst [vmem:[%s3 + $0x18] sm:$0xff] %v1112
  %1130 = vst [vmem:[%s3 + $0x20] sm:$0xff] %v1115
  %1131 = vst [vmem:[%s3 + $0x28] sm:$0xff] %v1118
  %1132 = vst [vmem:[%s3 + $0x30] sm:$0xff] %v1121
  %1133 = vst [vmem:[%s3 + $0x38] sm:$0xff] %v1124
  %1135 = vrot.lane.b32.xlu0 %v1046, 112
  %v1136 = vpop.permute.xlu0 %1135
  %1139 = vrot.lane.b32.xlu0 %v1040, 32
  %v1140 = vpop.permute.xlu0 %1139
  %v1142 = vsel %vm112, %v1002, %v993
  %vm1143 = vcmask 261120
  %v1144 = vsel %vm1143, %v1142, %v1136
  %vm1145 = vcmask 392192
  %v1146 = vsel %vm1145, %v1144, %v1140
  %vm1147 = vcmask 523264
  %1148 = vst.msk [vmem:[%s4] sm:$0xff] %vm1147, %v1146
  // Predicated region
  $region14: #{multi_regression_lstm.1} parent=0 // pred_check
    _
  $region15: #{multi_regression_lstm.1} parent=0 // pred_check_branch
    %1150 = sbr.rel (0) target = $region17
  $region16: #{multi_regression_lstm.1} parent=0 // pred_region
    _
  $region17: #{multi_regression_lstm.1} parent=0 // pred_fallthru
    _
  // Predicated region
  $region18: #{multi_regression_lstm.1} parent=0 // pred_check
    _
  $region19: #{multi_regression_lstm.1} parent=0 // pred_check_branch
    %1152 = sbr.rel (0) target = $region21
  $region20: #{multi_regression_lstm.1} parent=0 // pred_region
    _
  $region21: #{multi_regression_lstm.1} parent=0 // pred_fallthru
    _
  // Predicated region
  $region22: #{multi_regression_lstm.1} parent=0 // pred_check
    _
  $region23: #{multi_regression_lstm.1} parent=0 // pred_check_branch
    %1154 = sbr.rel (0) target = $region25
  $region24: #{multi_regression_lstm.1} parent=0 // pred_region
    _
  $region25: #{multi_regression_lstm.1} parent=0 // pred_fallthru
    _
  // Predicated region
  $region26: #{multi_regression_lstm.1} parent=0 // pred_check
    _
  $region27: #{multi_regression_lstm.1} parent=0 // pred_check_branch
    %1156 = sbr.rel (0) target = $region29
  $region28: #{multi_regression_lstm.1} parent=0 // pred_region
    _
  $region29: #{multi_regression_lstm.1} parent=0 // pred_fallthru
    _

</llo_original>
